<compile_context>
chip_gen: v5e
topology: v5e:2x2
jax: 0.10.0
libtpu: 0.0.40
codegen_flags: <defaults>
</compile_context>

<pallas_src>
import jax
import jax.numpy as jnp
import numpy as np
from jax.experimental import pallas as pl
from jax.experimental.pallas import tpu as pltpu

SCALE = 0.5 ** 0.5


def _res_layer_kernel(x_ref, halo_ref, w1_ref, w2_ref, b2_ref,
                      wf1_ref, bf1_ref, wf2_ref, bf2_ref,
                      out_ref, hbuf_ref):
    # x_ref    : (1, TT, Ts, C)          input tile (f32)
    # halo_ref : (1, PH, Ts, C)          P previous target rows (zeros for tile 0)
    # hbuf_ref : (TT+P, Ts+2P, mid) bf16 conv1 scratch (target halo + source pad)
    # out_ref  : (1, TT, Ts*C)           lane-dense output tile
    _, TT, Ts, C = x_ref.shape
    Th, Sp, mid = hbuf_ref.shape
    K = w2_ref.shape[0]
    P = (K - 1) // 2
    f32 = jnp.float32
    cdims = (((2,), (0,)), ((), ()))    # contract act last dim with weight dim 0

    # ---- conv1: 1x1 conv (no bias) == channel matmul, stored bf16 for the taps.
    xt = x_ref[0].astype(jnp.bfloat16)                                # (TT, Ts, C)
    ht = jax.lax.dot_general(xt, w1_ref[...], cdims,
                             preferred_element_type=f32)              # (TT, Ts, mid)
    hbuf_ref[P:P + TT, P:P + Ts, :] = ht.astype(jnp.bfloat16)

    if P > 0:
        # conv1 of the causal halo rows (tile 0 gets zero rows from the wrapper;
        # conv1 has no bias, so they stay zero — matches "same" target padding).
        xh = halo_ref[0].astype(jnp.bfloat16)                         # (P, Ts, C)
        hh = jax.lax.dot_general(xh, w1_ref[...], cdims,
                                 preferred_element_type=f32)
        hbuf_ref[0:P, P:P + Ts, :] = hh.astype(jnp.bfloat16)
        # zero the "same"-padding border columns along the source axis.
        zcol = jnp.zeros((Th, P, mid), jnp.bfloat16)
        hbuf_ref[:, 0:P, :] = zcol
        hbuf_ref[:, P + Ts:, :] = zcol

    # ---- mconv2: target-causal masked KxK conv as shift-and-matmul taps.
    # Kernel rows r > K//2 are masked to zero in the module, so only r <= K//2.
    acc = None
    for r in range(K // 2 + 1):
        for c in range(K):
            tap = hbuf_ref[r:r + TT, c:c + Ts, :]                     # (TT, Ts, mid) bf16
            d = jax.lax.dot_general(tap, w2_ref[r, c], cdims,
                                    preferred_element_type=f32)       # (TT, Ts, C)
            acc = d if acc is None else acc + d
    conv_out = acc + b2_ref[...]                                      # + (1, C)

    residual = x_ref[0].astype(f32)
    x1 = SCALE * (conv_out + residual)                                # (TT, Ts, C) f32

    # ---- FFN: fc1 -> relu -> fc2, then scaled residual (elementwise kept f32).
    y = jax.lax.dot_general(x1.astype(jnp.bfloat16), wf1_ref[...], cdims,
                            preferred_element_type=f32)               # (TT, Ts, ffn)
    y = jnp.maximum(y + bf1_ref[...], 0.0)
    y = jax.lax.dot_general(y.astype(jnp.bfloat16), wf2_ref[...], cdims,
                            preferred_element_type=f32)               # (TT, Ts, C)
    y = y + bf2_ref[...]
    out = SCALE * (y + x1)
    out_ref[0] = out.reshape(TT, Ts * C).astype(out_ref.dtype)


def _pick_target_tile(Tt, tile_t):
    """Largest divisor of Tt that is <= tile_t and sublane-friendly."""
    if Tt % tile_t == 0 and (tile_t % 8 == 0 or tile_t == Tt):
        return tile_t
    cands = [d for d in range(1, Tt + 1)
             if Tt % d == 0 and d <= tile_t and (d % 8 == 0 or d == Tt)]
    return max(cands) if cands else Tt


def res_layer_forward(x, params, kernel_size=3, tile_t=128):
    B, Tt, Ts, C = x.shape
    mid = params["w1"].shape[1]
    ffn = params["wf1"].shape[1]
    K = kernel_size
    P = (K - 1) // 2

    # Target-axis tile; default 128 keeps per-step VMEM to a few MiB even at
    # production Ts/C (size down further for v7x's 64 MiB VMEM if needed).
    TT = _pick_target_tile(Tt, tile_t)
    nT = Tt // TT
    PH = max(P, 1)

    # Tiny per-tile causal halo (the P target rows preceding each tile; zeros
    # for tile 0).  Replaces the previous full zero-padded HBM copy of x.
    if P > 0:
        row_idx = np.arange(nT)[:, None] * TT - P + np.arange(P)[None, :]   # (nT, P)
        valid = jnp.asarray(row_idx >= 0)
        idx = jnp.asarray(np.maximum(row_idx, 0).reshape(-1))
        halo = jnp.take(x, idx, axis=1).reshape(B, nT, P, Ts, C)
        halo = jnp.where(valid[None, :, :, None, None], halo,
                         jnp.zeros((), x.dtype))
        halo = halo.reshape(B * nT, P, Ts, C)
    else:
        halo = jnp.zeros((B * nT, PH, Ts, C), x.dtype)

    # Matmul operands in bf16 (f32 accumulation in-kernel); biases stay f32.
    w1 = params["w1"].astype(jnp.bfloat16)
    w2 = params["w2"].astype(jnp.bfloat16)
    wf1 = params["wf1"].astype(jnp.bfloat16)
    wf2 = params["wf2"].astype(jnp.bfloat16)

    n_taps = (K // 2 + 1) * K
    flops = int(2 * B * Tt * Ts * (C * mid + n_taps * mid * C + 2 * C * ffn))
    bytes_accessed = int(2 * B * Tt * Ts * C * x.dtype.itemsize
                         + 2 * (C * mid + K * K * mid * C + C * ffn + ffn * C)
                         + 4 * (2 * C + ffn))

    out = pl.pallas_call(
        _res_layer_kernel,
        out_shape=jax.ShapeDtypeStruct((B, Tt, Ts * C), x.dtype),
        grid=(B, nT),
        in_specs=[
            pl.BlockSpec((1, TT, Ts, C), lambda b, i: (b, i, 0, 0)),
            pl.BlockSpec((1, PH, Ts, C), lambda b, i: (b * nT + i, 0, 0, 0)),
            pl.BlockSpec((C, mid), lambda b, i: (0, 0)),
            pl.BlockSpec((K, K, mid, C), lambda b, i: (0, 0, 0, 0)),
            pl.BlockSpec((1, C), lambda b, i: (0, 0)),
            pl.BlockSpec((C, ffn), lambda b, i: (0, 0)),
            pl.BlockSpec((1, ffn), lambda b, i: (0, 0)),
            pl.BlockSpec((ffn, C), lambda b, i: (0, 0)),
            pl.BlockSpec((1, C), lambda b, i: (0, 0)),
        ],
        out_specs=pl.BlockSpec((1, TT, Ts * C), lambda b, i: (b, i, 0)),
        scratch_shapes=[pltpu.VMEM((TT + P, Ts + 2 * P, mid), jnp.bfloat16)],
        compiler_params=pltpu.CompilerParams(
            dimension_semantics=("parallel", "parallel")),
        cost_estimate=pl.CostEstimate(flops=flops, transcendentals=0,
                                      bytes_accessed=bytes_accessed),
    )(x, halo, w1, w2, params["b2"], wf1, params["bf1"], wf2, params["bf2"])

    return out.reshape(B, Tt, Ts, C)


def ref_forward(x, params, K):
    """Pure-JAX f32 reference (same math as the PyTorch module in eval mode)."""
    hi = jax.lax.Precision.HIGHEST
    P = (K - 1) // 2
    residual = x
    h = jnp.einsum("btsc,cm->btsm", x, params["w1"], precision=hi)
    row_mask = (jnp.arange(K) <= K // 2).astype(jnp.float32)      # causal target mask
    w2m = params["w2"] * row_mask[:, None, None, None]
    y = jax.lax.conv_general_dilated(
        h, w2m, window_strides=(1, 1), padding=((P, P), (P, P)),
        dimension_numbers=("NHWC", "HWIO", "NHWC"), precision=hi)
    y = y + params["b2"]
    x1 = SCALE * (y + residual)
    f = jax.nn.relu(jnp.einsum("btsc,cf->btsf", x1, params["wf1"], precision=hi)
                    + params["bf1"])
    f = jnp.einsum("btsf,fc->btsc", f, params["wf2"], precision=hi) + params["bf2"]
    return SCALE * (f + x1)


def init_params(key, C, mid, ffn, K):
    ks = jax.random.split(key, 5)
    w1 = jax.random.normal(ks[0], (C, mid), jnp.float32) / np.sqrt(C)
    w2 = jax.random.normal(ks[1], (K, K, mid, C), jnp.float32) / np.sqrt(mid * K * K)
    b2 = 0.1 * jax.random.normal(ks[2], (1, C), jnp.float32)
    # fc layers: xavier_uniform weights, zero bias (matches the Linear() helper).
    lim1 = np.sqrt(6.0 / (C + ffn))
    wf1 = jax.random.uniform(ks[3], (C, ffn), jnp.float32, -lim1, lim1)
    bf1 = jnp.zeros((1, ffn), jnp.float32)
    lim2 = np.sqrt(6.0 / (ffn + C))
    wf2 = jax.random.uniform(ks[4], (ffn, C), jnp.float32, -lim2, lim2)
    bf2 = jnp.zeros((1, C), jnp.float32)
    return dict(w1=w1, w2=w2, b2=b2, wf1=wf1, bf1=bf1, wf2=wf2, bf2=bf2)


if __name__ == "__main__":
    key = jax.random.PRNGKey(0)
    kx, kp = jax.random.split(key)
    B, Tt, Ts, C = 2, 16, 16, 8          # batch, target len, source len, num_features
    mid, ffn, K = 8, 16, 3               # reduce_dim, ffn_dim, kernel_size

    x = jax.random.normal(kx, (B, Tt, Ts, C), jnp.float32)
    params = init_params(kp, C, mid, ffn, K)

    # tile_t=8 -> grid=(B, 2): exercises the target tiling + causal halo path.
    out = res_layer_forward(x, params, kernel_size=K, tile_t=8)
    out = jax.block_until_ready(out)

    ref = ref_forward(x, params, K)
    # bf16 matmul inputs with f32 accumulation -> relaxed tolerance vs f32 ref.
    np.testing.assert_allclose(np.asarray(out), np.asarray(ref), rtol=2e-2, atol=3e-2)
    print("KERNEL_OK")
</pallas_src>

<mosaic_0001>
module attributes {stable_mosaic.version = 11 : i64} {
  func.func @_res_layer_kernel(%arg0: i32, %arg1: i32, %arg2: memref<1x8x16x8xf32, #tpu.memory_space<vmem>>, %arg3: memref<1x1x16x8xf32, #tpu.memory_space<vmem>>, %arg4: memref<8x8xbf16, #tpu.memory_space<vmem>>, %arg5: memref<3x3x8x8xbf16, #tpu.memory_space<vmem>>, %arg6: memref<1x8xf32, #tpu.memory_space<vmem>>, %arg7: memref<8x16xbf16, #tpu.memory_space<vmem>>, %arg8: memref<1x16xf32, #tpu.memory_space<vmem>>, %arg9: memref<16x8xbf16, #tpu.memory_space<vmem>>, %arg10: memref<1x8xf32, #tpu.memory_space<vmem>>, %arg11: memref<1x8x128xf32, #tpu.memory_space<vmem>>, %arg12: memref<9x18x8xbf16, #tpu.memory_space<vmem>>) attributes {dimension_semantics = [#tpu.dimension_semantics<parallel>, #tpu.dimension_semantics<parallel>], iteration_bounds = array<i64: 2, 2>, scalar_prefetch = 0 : i64, scratch_operands = 1 : i64, tpu.core_type = #tpu.core_type<tc>, window_params = [{transform_indices = @transform_0, window_bounds = array<i64: 1, 8, 16, 8>}, {transform_indices = @transform_1, window_bounds = array<i64: 1, 1, 16, 8>}, {pipeline_mode = #tpu.pipeline_mode<synchronous>, transform_indices = @transform_2, window_bounds = array<i64: 8, 8>}, {pipeline_mode = #tpu.pipeline_mode<synchronous>, transform_indices = @transform_3, window_bounds = array<i64: 3, 3, 8, 8>}, {pipeline_mode = #tpu.pipeline_mode<synchronous>, transform_indices = @transform_4, window_bounds = array<i64: 1, 8>}, {pipeline_mode = #tpu.pipeline_mode<synchronous>, transform_indices = @transform_5, window_bounds = array<i64: 8, 16>}, {pipeline_mode = #tpu.pipeline_mode<synchronous>, transform_indices = @transform_6, window_bounds = array<i64: 1, 16>}, {pipeline_mode = #tpu.pipeline_mode<synchronous>, transform_indices = @transform_7, window_bounds = array<i64: 16, 8>}, {pipeline_mode = #tpu.pipeline_mode<synchronous>, transform_indices = @transform_8, window_bounds = array<i64: 1, 8>}, {transform_indices = @transform_9, window_bounds = array<i64: 1, 8, 128>}]} {
    %c0 = arith.constant 0 : index
    %c0_0 = arith.constant 0 : index
    %c0_1 = arith.constant 0 : index
    %c0_2 = arith.constant 0 : index
    %0 = vector.load %arg2[%c0, %c0_0, %c0_1, %c0_2] : memref<1x8x16x8xf32, #tpu.memory_space<vmem>>, vector<1x8x16x8xf32>
    %1 = vector.shape_cast %0 : vector<1x8x16x8xf32> to vector<8x16x8xf32>
    %2 = arith.truncf %1 : vector<8x16x8xf32> to vector<8x16x8xbf16>
    %c0_3 = arith.constant 0 : index
    %c0_4 = arith.constant 0 : index
    %3 = vector.load %arg4[%c0_3, %c0_4] : memref<8x8xbf16, #tpu.memory_space<vmem>>, vector<8x8xbf16>
    %cst = arith.constant dense<0.000000e+00> : vector<8x16x8xf32>
    %4 = tpu.matmul %2, %3, %cst {dimension_numbers = #tpu.dot_dimension_numbers<[2], [0], [0, 1], [1], [0, 0, 0, 1, 1, 1], [], []>} : vector<8x16x8xbf16>, vector<8x8xbf16>, vector<8x16x8xf32> -> vector<8x16x8xf32>
    %5 = arith.truncf %4 : vector<8x16x8xf32> to vector<8x16x8xbf16>
    %c1 = arith.constant 1 : index
    %c1_5 = arith.constant 1 : index
    %c0_6 = arith.constant 0 : index
    %6 = vector.load %arg12[%c1, %c1_5, %c0_6] : memref<9x18x8xbf16, #tpu.memory_space<vmem>>, vector<8x16x8xbf16>
    tpu.vector_store %arg12[%c1, %c1_5, %c0_6], %5 {strides = array<i32>} : memref<9x18x8xbf16, #tpu.memory_space<vmem>>, vector<8x16x8xbf16>,
    %c0_7 = arith.constant 0 : index
    %c0_8 = arith.constant 0 : index
    %c0_9 = arith.constant 0 : index
    %c0_10 = arith.constant 0 : index
    %7 = vector.load %arg3[%c0_7, %c0_8, %c0_9, %c0_10] : memref<1x1x16x8xf32, #tpu.memory_space<vmem>>, vector<1x1x16x8xf32>
    %8 = vector.shape_cast %7 : vector<1x1x16x8xf32> to vector<1x16x8xf32>
    %9 = arith.truncf %8 : vector<1x16x8xf32> to vector<1x16x8xbf16>
    %c0_11 = arith.constant 0 : index
    %c0_12 = arith.constant 0 : index
    %10 = vector.load %arg4[%c0_11, %c0_12] : memref<8x8xbf16, #tpu.memory_space<vmem>>, vector<8x8xbf16>
    %cst_13 = arith.constant dense<0.000000e+00> : vector<1x16x8xf32>
    %11 = tpu.matmul %9, %10, %cst_13 {dimension_numbers = #tpu.dot_dimension_numbers<[2], [0], [0, 1], [1], [0, 0, 0, 1, 1, 1], [], []>} : vector<1x16x8xbf16>, vector<8x8xbf16>, vector<1x16x8xf32> -> vector<1x16x8xf32>
    %12 = arith.truncf %11 : vector<1x16x8xf32> to vector<1x16x8xbf16>
    %c0_14 = arith.constant 0 : index
    %c1_15 = arith.constant 1 : index
    %c0_16 = arith.constant 0 : index
    %13 = vector.load %arg12[%c0_14, %c1_15, %c0_16] : memref<9x18x8xbf16, #tpu.memory_space<vmem>>, vector<1x16x8xbf16>
    tpu.vector_store %arg12[%c0_14, %c1_15, %c0_16], %12 {strides = array<i32>} : memref<9x18x8xbf16, #tpu.memory_space<vmem>>, vector<1x16x8xbf16>,
    %cst_17 = arith.constant 0.000000e+00 : bf16
    %14 = vector.broadcast %cst_17 : bf16 to vector<9x1x8xbf16>
    %c0_18 = arith.constant 0 : index
    %c0_19 = arith.constant 0 : index
    %c0_20 = arith.constant 0 : index
    %15 = vector.load %arg12[%c0_18, %c0_19, %c0_20] : memref<9x18x8xbf16, #tpu.memory_space<vmem>>, vector<9x1x8xbf16>
    tpu.vector_store %arg12[%c0_18, %c0_19, %c0_20], %14 {strides = array<i32>} : memref<9x18x8xbf16, #tpu.memory_space<vmem>>, vector<9x1x8xbf16>,
    %c0_21 = arith.constant 0 : index
    %c17 = arith.constant 17 : index
    %c0_22 = arith.constant 0 : index
    %16 = vector.load %arg12[%c0_21, %c17, %c0_22] : memref<9x18x8xbf16, #tpu.memory_space<vmem>>, vector<9x1x8xbf16>
    tpu.vector_store %arg12[%c0_21, %c17, %c0_22], %14 {strides = array<i32>} : memref<9x18x8xbf16, #tpu.memory_space<vmem>>, vector<9x1x8xbf16>,
    %c0_23 = arith.constant 0 : index
    %c0_24 = arith.constant 0 : index
    %c0_25 = arith.constant 0 : index
    %17 = vector.load %arg12[%c0_23, %c0_24, %c0_25] : memref<9x18x8xbf16, #tpu.memory_space<vmem>>, vector<8x16x8xbf16>
    %c0_26 = arith.constant 0 : index
    %c0_27 = arith.constant 0 : index
    %c0_28 = arith.constant 0 : index
    %c0_29 = arith.constant 0 : index
    %18 = vector.load %arg5[%c0_26, %c0_27, %c0_28, %c0_29] : memref<3x3x8x8xbf16, #tpu.memory_space<vmem>>, vector<1x1x8x8xbf16>
    %19 = vector.shape_cast %18 : vector<1x1x8x8xbf16> to vector<8x8xbf16>
    %cst_30 = arith.constant dense<0.000000e+00> : vector<8x16x8xf32>
    %20 = tpu.matmul %17, %19, %cst_30 {dimension_numbers = #tpu.dot_dimension_numbers<[2], [0], [0, 1], [1], [0, 0, 0, 1, 1, 1], [], []>} : vector<8x16x8xbf16>, vector<8x8xbf16>, vector<8x16x8xf32> -> vector<8x16x8xf32>
    %c0_31 = arith.constant 0 : index
    %c1_32 = arith.constant 1 : index
    %c0_33 = arith.constant 0 : index
    %21 = vector.load %arg12[%c0_31, %c1_32, %c0_33] : memref<9x18x8xbf16, #tpu.memory_space<vmem>>, vector<8x16x8xbf16>
    %c0_34 = arith.constant 0 : index
    %c1_35 = arith.constant 1 : index
    %c0_36 = arith.constant 0 : index
    %c0_37 = arith.constant 0 : index
    %22 = vector.load %arg5[%c0_34, %c1_35, %c0_36, %c0_37] : memref<3x3x8x8xbf16, #tpu.memory_space<vmem>>, vector<1x1x8x8xbf16>
    %23 = vector.shape_cast %22 : vector<1x1x8x8xbf16> to vector<8x8xbf16>
    %cst_38 = arith.constant dense<0.000000e+00> : vector<8x16x8xf32>
    %24 = tpu.matmul %21, %23, %cst_38 {dimension_numbers = #tpu.dot_dimension_numbers<[2], [0], [0, 1], [1], [0, 0, 0, 1, 1, 1], [], []>} : vector<8x16x8xbf16>, vector<8x8xbf16>, vector<8x16x8xf32> -> vector<8x16x8xf32>
    %25 = arith.addf %20, %24 : vector<8x16x8xf32>
    %c0_39 = arith.constant 0 : index
    %c2 = arith.constant 2 : index
    %c0_40 = arith.constant 0 : index
    %26 = vector.load %arg12[%c0_39, %c2, %c0_40] : memref<9x18x8xbf16, #tpu.memory_space<vmem>>, vector<8x16x8xbf16>
    %c0_41 = arith.constant 0 : index
    %c2_42 = arith.constant 2 : index
    %c0_43 = arith.constant 0 : index
    %c0_44 = arith.constant 0 : index
    %27 = vector.load %arg5[%c0_41, %c2_42, %c0_43, %c0_44] : memref<3x3x8x8xbf16, #tpu.memory_space<vmem>>, vector<1x1x8x8xbf16>
    %28 = vector.shape_cast %27 : vector<1x1x8x8xbf16> to vector<8x8xbf16>
    %cst_45 = arith.constant dense<0.000000e+00> : vector<8x16x8xf32>
    %29 = tpu.matmul %26, %28, %cst_45 {dimension_numbers = #tpu.dot_dimension_numbers<[2], [0], [0, 1], [1], [0, 0, 0, 1, 1, 1], [], []>} : vector<8x16x8xbf16>, vector<8x8xbf16>, vector<8x16x8xf32> -> vector<8x16x8xf32>
    %30 = arith.addf %25, %29 : vector<8x16x8xf32>
    %c1_46 = arith.constant 1 : index
    %c0_47 = arith.constant 0 : index
    %c0_48 = arith.constant 0 : index
    %31 = vector.load %arg12[%c1_46, %c0_47, %c0_48] : memref<9x18x8xbf16, #tpu.memory_space<vmem>>, vector<8x16x8xbf16>
    %c1_49 = arith.constant 1 : index
    %c0_50 = arith.constant 0 : index
    %c0_51 = arith.constant 0 : index
    %c0_52 = arith.constant 0 : index
    %32 = vector.load %arg5[%c1_49, %c0_50, %c0_51, %c0_52] : memref<3x3x8x8xbf16, #tpu.memory_space<vmem>>, vector<1x1x8x8xbf16>
    %33 = vector.shape_cast %32 : vector<1x1x8x8xbf16> to vector<8x8xbf16>
    %cst_53 = arith.constant dense<0.000000e+00> : vector<8x16x8xf32>
    %34 = tpu.matmul %31, %33, %cst_53 {dimension_numbers = #tpu.dot_dimension_numbers<[2], [0], [0, 1], [1], [0, 0, 0, 1, 1, 1], [], []>} : vector<8x16x8xbf16>, vector<8x8xbf16>, vector<8x16x8xf32> -> vector<8x16x8xf32>
    %35 = arith.addf %30, %34 : vector<8x16x8xf32>
    %c1_54 = arith.constant 1 : index
    %c1_55 = arith.constant 1 : index
    %c0_56 = arith.constant 0 : index
    %36 = vector.load %arg12[%c1_54, %c1_55, %c0_56] : memref<9x18x8xbf16, #tpu.memory_space<vmem>>, vector<8x16x8xbf16>
    %c1_57 = arith.constant 1 : index
    %c1_58 = arith.constant 1 : index
    %c0_59 = arith.constant 0 : index
    %c0_60 = arith.constant 0 : index
    %37 = vector.load %arg5[%c1_57, %c1_58, %c0_59, %c0_60] : memref<3x3x8x8xbf16, #tpu.memory_space<vmem>>, vector<1x1x8x8xbf16>
    %38 = vector.shape_cast %37 : vector<1x1x8x8xbf16> to vector<8x8xbf16>
    %cst_61 = arith.constant dense<0.000000e+00> : vector<8x16x8xf32>
    %39 = tpu.matmul %36, %38, %cst_61 {dimension_numbers = #tpu.dot_dimension_numbers<[2], [0], [0, 1], [1], [0, 0, 0, 1, 1, 1], [], []>} : vector<8x16x8xbf16>, vector<8x8xbf16>, vector<8x16x8xf32> -> vector<8x16x8xf32>
    %40 = arith.addf %35, %39 : vector<8x16x8xf32>
    %c1_62 = arith.constant 1 : index
    %c2_63 = arith.constant 2 : index
    %c0_64 = arith.constant 0 : index
    %41 = vector.load %arg12[%c1_62, %c2_63, %c0_64] : memref<9x18x8xbf16, #tpu.memory_space<vmem>>, vector<8x16x8xbf16>
    %c1_65 = arith.constant 1 : index
    %c2_66 = arith.constant 2 : index
    %c0_67 = arith.constant 0 : index
    %c0_68 = arith.constant 0 : index
    %42 = vector.load %arg5[%c1_65, %c2_66, %c0_67, %c0_68] : memref<3x3x8x8xbf16, #tpu.memory_space<vmem>>, vector<1x1x8x8xbf16>
    %43 = vector.shape_cast %42 : vector<1x1x8x8xbf16> to vector<8x8xbf16>
    %cst_69 = arith.constant dense<0.000000e+00> : vector<8x16x8xf32>
    %44 = tpu.matmul %41, %43, %cst_69 {dimension_numbers = #tpu.dot_dimension_numbers<[2], [0], [0, 1], [1], [0, 0, 0, 1, 1, 1], [], []>} : vector<8x16x8xbf16>, vector<8x8xbf16>, vector<8x16x8xf32> -> vector<8x16x8xf32>
    %45 = arith.addf %40, %44 : vector<8x16x8xf32>
    %c0_70 = arith.constant 0 : index
    %c0_71 = arith.constant 0 : index
    %46 = vector.load %arg6[%c0_70, %c0_71] : memref<1x8xf32, #tpu.memory_space<vmem>>, vector<1x8xf32>
    %47 = vector.shape_cast %46 : vector<1x8xf32> to vector<1x1x8xf32>
    %48 = vector.broadcast %47 : vector<1x1x8xf32> to vector<8x16x8xf32>
    %49 = arith.addf %45, %48 : vector<8x16x8xf32>
    %c0_72 = arith.constant 0 : index
    %c0_73 = arith.constant 0 : index
    %c0_74 = arith.constant 0 : index
    %c0_75 = arith.constant 0 : index
    %50 = vector.load %arg2[%c0_72, %c0_73, %c0_74, %c0_75] : memref<1x8x16x8xf32, #tpu.memory_space<vmem>>, vector<1x8x16x8xf32>
    %51 = vector.shape_cast %50 : vector<1x8x16x8xf32> to vector<8x16x8xf32>
    %52 = arith.addf %49, %51 : vector<8x16x8xf32>
    %cst_76 = arith.constant 0.707106769 : f32
    %53 = vector.broadcast %cst_76 : f32 to vector<8x16x8xf32>
    %54 = arith.mulf %53, %52 : vector<8x16x8xf32>
    %55 = arith.truncf %54 : vector<8x16x8xf32> to vector<8x16x8xbf16>
    %c0_77 = arith.constant 0 : index
    %c0_78 = arith.constant 0 : index
    %56 = vector.load %arg7[%c0_77, %c0_78] : memref<8x16xbf16, #tpu.memory_space<vmem>>, vector<8x16xbf16>
    %cst_79 = arith.constant dense<0.000000e+00> : vector<8x16x16xf32>
    %57 = tpu.matmul %55, %56, %cst_79 {dimension_numbers = #tpu.dot_dimension_numbers<[2], [0], [0, 1], [1], [0, 0, 0, 1, 1, 1], [], []>} : vector<8x16x8xbf16>, vector<8x16xbf16>, vector<8x16x16xf32> -> vector<8x16x16xf32>
    %c0_80 = arith.constant 0 : index
    %c0_81 = arith.constant 0 : index
    %58 = vector.load %arg8[%c0_80, %c0_81] : memref<1x16xf32, #tpu.memory_space<vmem>>, vector<1x16xf32>
    %59 = vector.shape_cast %58 : vector<1x16xf32> to vector<1x1x16xf32>
    %60 = vector.broadcast %59 : vector<1x1x16xf32> to vector<8x16x16xf32>
    %61 = arith.addf %57, %60 : vector<8x16x16xf32>
    %cst_82 = arith.constant 0.000000e+00 : f32
    %62 = vector.broadcast %cst_82 : f32 to vector<8x16x16xf32>
    %63 = arith.maximumf %61, %62 : vector<8x16x16xf32>
    %64 = arith.truncf %63 : vector<8x16x16xf32> to vector<8x16x16xbf16>
    %c0_83 = arith.constant 0 : index
    %c0_84 = arith.constant 0 : index
    %65 = vector.load %arg9[%c0_83, %c0_84] : memref<16x8xbf16, #tpu.memory_space<vmem>>, vector<16x8xbf16>
    %cst_85 = arith.constant dense<0.000000e+00> : vector<8x16x8xf32>
    %66 = tpu.matmul %64, %65, %cst_85 {dimension_numbers = #tpu.dot_dimension_numbers<[2], [0], [0, 1], [1], [0, 0, 0, 1, 1, 1], [], []>} : vector<8x16x16xbf16>, vector<16x8xbf16>, vector<8x16x8xf32> -> vector<8x16x8xf32>
    %c0_86 = arith.constant 0 : index
    %c0_87 = arith.constant 0 : index
    %67 = vector.load %arg10[%c0_86, %c0_87] : memref<1x8xf32, #tpu.memory_space<vmem>>, vector<1x8xf32>
    %68 = vector.shape_cast %67 : vector<1x8xf32> to vector<1x1x8xf32>
    %69 = vector.broadcast %68 : vector<1x1x8xf32> to vector<8x16x8xf32>
    %70 = arith.addf %66, %69 : vector<8x16x8xf32>
    %71 = arith.addf %70, %54 : vector<8x16x8xf32>
    %cst_88 = arith.constant 0.707106769 : f32
    %72 = vector.broadcast %cst_88 : f32 to vector<8x16x8xf32>
    %73 = arith.mulf %72, %71 : vector<8x16x8xf32>
    %74 = vector.shape_cast %73 : vector<8x16x8xf32> to vector<8x128xf32>
    %c0_89 = arith.constant 0 : index
    %c0_90 = arith.constant 0 : index
    %c0_91 = arith.constant 0 : index
    %75 = vector.load %arg11[%c0_89, %c0_90, %c0_91] : memref<1x8x128xf32, #tpu.memory_space<vmem>>, vector<1x8x128xf32>
    %76 = vector.shape_cast %75 : vector<1x8x128xf32> to vector<8x128xf32>
    %77 = vector.shape_cast %74 : vector<8x128xf32> to vector<1x8x128xf32>
    tpu.vector_store %arg11[%c0_89, %c0_90, %c0_91], %77 {strides = array<i32>} : memref<1x8x128xf32, #tpu.memory_space<vmem>>, vector<1x8x128xf32>,
    return
  }
  func.func @transform_0(%arg0: i32, %arg1: i32) -> (i32, i32, i32, i32) {
    %c0_i32 = arith.constant 0 : i32
    %c0_i32_0 = arith.constant 0 : i32
    %c0_i32_1 = arith.constant 0 : i32
    return %arg0, %arg1, %c0_i32, %c0_i32_0 : i32, i32, i32, i32
  }
  func.func @transform_1(%arg0: i32, %arg1: i32) -> (i32, i32, i32, i32) {
    %c2_i32 = arith.constant 2 : i32
    %0 = arith.muli %arg0, %c2_i32 : i32
    %1 = arith.addi %0, %arg1 : i32
    %c0_i32 = arith.constant 0 : i32
    %c0_i32_0 = arith.constant 0 : i32
    %c0_i32_1 = arith.constant 0 : i32
    %c0_i32_2 = arith.constant 0 : i32
    return %1, %c0_i32, %c0_i32_0, %c0_i32_1 : i32, i32, i32, i32
  }
  func.func @transform_2(%arg0: i32, %arg1: i32) -> (i32, i32) {
    %c0_i32 = arith.constant 0 : i32
    %c0_i32_0 = arith.constant 0 : i32
    %c0_i32_1 = arith.constant 0 : i32
    return %c0_i32, %c0_i32_0 : i32, i32
  }
  func.func @transform_3(%arg0: i32, %arg1: i32) -> (i32, i32, i32, i32) {
    %c0_i32 = arith.constant 0 : i32
    %c0_i32_0 = arith.constant 0 : i32
    %c0_i32_1 = arith.constant 0 : i32
    %c0_i32_2 = arith.constant 0 : i32
    %c0_i32_3 = arith.constant 0 : i32
    return %c0_i32, %c0_i32_0, %c0_i32_1, %c0_i32_2 : i32, i32, i32, i32
  }
  func.func @transform_4(%arg0: i32, %arg1: i32) -> (i32, i32) {
    %c0_i32 = arith.constant 0 : i32
    %c0_i32_0 = arith.constant 0 : i32
    %c0_i32_1 = arith.constant 0 : i32
    return %c0_i32, %c0_i32_0 : i32, i32
  }
  func.func @transform_5(%arg0: i32, %arg1: i32) -> (i32, i32) {
    %c0_i32 = arith.constant 0 : i32
    %c0_i32_0 = arith.constant 0 : i32
    %c0_i32_1 = arith.constant 0 : i32
    return %c0_i32, %c0_i32_0 : i32, i32
  }
  func.func @transform_6(%arg0: i32, %arg1: i32) -> (i32, i32) {
    %c0_i32 = arith.constant 0 : i32
    %c0_i32_0 = arith.constant 0 : i32
    %c0_i32_1 = arith.constant 0 : i32
    return %c0_i32, %c0_i32_0 : i32, i32
  }
  func.func @transform_7(%arg0: i32, %arg1: i32) -> (i32, i32) {
    %c0_i32 = arith.constant 0 : i32
    %c0_i32_0 = arith.constant 0 : i32
    %c0_i32_1 = arith.constant 0 : i32
    return %c0_i32, %c0_i32_0 : i32, i32
  }
  func.func @transform_8(%arg0: i32, %arg1: i32) -> (i32, i32) {
    %c0_i32 = arith.constant 0 : i32
    %c0_i32_0 = arith.constant 0 : i32
    %c0_i32_1 = arith.constant 0 : i32
    return %c0_i32, %c0_i32_0 : i32, i32
  }
  func.func @transform_9(%arg0: i32, %arg1: i32) -> (i32, i32, i32) {
    %c0_i32 = arith.constant 0 : i32
    %c0_i32_0 = arith.constant 0 : i32
    return %arg0, %arg1, %c0_i32 : i32, i32, i32
  }
}

</mosaic_0001>

<llo_original>
// kernel: tpu_custom_call.1
$region0: #{tpu_custom_call.1}
  #allocation0 [shape = 'u32[]', space=smem, size = 0x4, offset = 0x4, fixed_abs, tag = 'smem constant byte address 0x4 - core index']
  #allocation1 [shape = 'u32[72,128]{1,0:T(1,128)}', space=vmem, size = 0x9000, scoped, tag = 'internal scratch']
  #allocation2 [shape = 'bf16[9,18,8]{2,1,0:T(8,128)(2,1)}', space=vmem, size = 0xd800, scoped, tag = 'scratch operand']
  %s0 = inlined_call_operand.vmem [shape: f32[2,16,16,8], index: 0, kind: input, shape index: {}]
  %s1 = inlined_call_operand.vmem [shape: f32[4,1,16,8], index: 1, kind: input, shape index: {}]
  %s2 = inlined_call_operand.vmem [shape: bf16[8,8], index: 2, kind: input, shape index: {}]
  %s3 = inlined_call_operand.vmem [shape: bf16[3,3,8,8], index: 3, kind: input, shape index: {}]
  %s4 = inlined_call_operand.vmem [shape: f32[1,8], index: 4, kind: input, shape index: {}]
  %s5 = inlined_call_operand.vmem [shape: bf16[8,16], index: 5, kind: input, shape index: {}]
  %s6 = inlined_call_operand.vmem [shape: f32[1,16], index: 6, kind: input, shape index: {}]
  %s7 = inlined_call_operand.vmem [shape: bf16[16,8], index: 7, kind: input, shape index: {}]
  %s8 = inlined_call_operand.vmem [shape: f32[1,8], index: 8, kind: input, shape index: {}]
  %s9 = inlined_call_operand.hbm [shape: f32[2,16,128], index: 9, kind: output, shape index: {}]
  %s10 = sld [smem:[#allocation0]]
  $region69: #{tpu_custom_call.1} parent=0
    _
  %s12 = ssub.s32 1, %s10
  %s13 = scalar_select 0, %s12, %s10
  $region1: #{tpu_custom_call.1} parent=0
    #allocation3 [shape = 'u8[8192]{0}', space=vmem, size = 0x2000, scoped, tag = 'output window, operand 0']
    #allocation4 [shape = 's32[2]{0}', space=sflag, size = 0x8, scoped, tag = 'scoped memory for tpu_custom_call.1']
    %14 = vsyncpa [#allocation4], 0
    %s15 = scalar_lea.sflag [#allocation4], 1
    %16 = vsyncpa %s15, 0
    loop: start=0, step=1, limit=6
    $region2: #{tpu_custom_call.1} parent=1 // loop_pre_header
      _
    $region3: #{tpu_custom_call.1} parent=1 // loop_header
      %s18 = sphi 0, %s22
      %p19 = scmp.ge.s32.totalorder %s18, 6
      %s25 = sphi 0, %s37
      %s26 = sphi 0, %s33
      %s27 = sphi 0, %s25
      %s28 = sphi 0, %s26
      %s29 = sphi 0, %s27
      %s30 = sphi 0, %s28
      %s42 = sphi 0, %s44
      %s45 = sphi 0, %s42
      %s46 = sphi 0, %s45
      %s62 = sphi 0, %s46
      %s72 = sphi 0, %s74
      %s75 = sphi 0, %s72
      %s76 = sphi 0, %s75
      %s92 = sphi 0, %s76
      %s96 = sphi 0, %s96
      %s98 = sphi 0, %s96
      %s99 = sphi 0, %s98
      %s113 = sphi 0, %s99
      %s117 = sphi 0, %s117
      %s119 = sphi 0, %s117
      %s120 = sphi 0, %s119
      %s134 = sphi 0, %s120
      %s138 = sphi 0, %s138
      %s140 = sphi 0, %s138
      %s141 = sphi 0, %s140
      %s155 = sphi 0, %s141
      %s159 = sphi 0, %s159
      %s161 = sphi 0, %s159
      %s162 = sphi 0, %s161
      %s176 = sphi 0, %s162
      %s180 = sphi 0, %s180
      %s182 = sphi 0, %s180
      %s183 = sphi 0, %s182
      %s197 = sphi 0, %s183
      %s201 = sphi 0, %s201
      %s203 = sphi 0, %s201
      %s204 = sphi 0, %s203
      %s218 = sphi 0, %s204
      %s222 = sphi 0, %s222
      %s224 = sphi 0, %s222
      %s225 = sphi 0, %s224
      %s239 = sphi 0, %s225
      %s247 = sphi 0, %s249
      %s250 = sphi 0, %s247
      %s251 = sphi 0, %s250
      %s267 = sphi 0, %s251
    $region4: #{tpu_custom_call.1} parent=1 // loop_header_branch
      %21 = sbr.rel (%p19) target = $region8
    $region5: #{tpu_custom_call.1} parent=1 // loop_body
      %s23 = ssub.s32 %s18, 1
      %s24 = ssub.s32 %s18, 2
      %s31 = sadd.s32 1, %s26
      %p32 = scmp.ge.s32.totalorder %s31, 2
      %s33 = scalar_select %p32, 0, %s31
      %s34 = sadd.s32 1, %s25
      %s35 = scalar_select %p32, %s34, %s25
      %p36 = scmp.ge.s32.totalorder %s35, 2
      %s37 = scalar_select %p36, 0, %s35
      %s38 = ssub.s32 %s25, %s37
      %s39 = ssub.s32 %s26, %s33
      %s40 = sor.u32 %s38, %s39
      %p41 = scmp.eq.s32.totalorder %s40, 0
      %s43 = sadd.s32 %s42, 1
      %s44 = scalar_select %p41, %s42, %s43
      %p47 = pneg %p41
      %p48 = scmp.eq.s32.totalorder %s18, 3
      %p49 = por %p47, %p48
      %p50 = scmp.ne.s32.totalorder %s42, %s45
      %p51 = scmp.eq.s32.totalorder %s18, 0
      %p52 = por %p50, %p51
      %p53 = scmp.ne.s32.totalorder %s42, %s45
      %p54 = scmp.eq.s32.totalorder %s23, 3
      %p55 = por %p53, %p54
      %p56 = scmp.ne.s32.totalorder %s45, %s46
      %p57 = scmp.eq.s32.totalorder %s23, 0
      %p58 = por %p56, %p57
      %p59 = scmp.ne.s32.totalorder %s45, %s46
      %p60 = scmp.eq.s32.totalorder %s24, 3
      %p61 = por %p59, %p60
      %p63 = scmp.ne.s32.totalorder %s46, %s62
      %p64 = scmp.eq.s32.totalorder %s24, 0
      %p65 = por %p63, %p64
      %s66 = smul.u32 %s25, 2
      %s67 = sadd.s32 %s66, %s26
      %s68 = smul.u32 %s37, 2
      %s69 = sadd.s32 %s68, %s33
      %s70 = ssub.s32 %s67, %s69
      %p71 = scmp.eq.s32.totalorder %s70, 0
      %s73 = sadd.s32 %s72, 1
      %s74 = scalar_select %p71, %s72, %s73
      %p77 = pneg %p71
      %p78 = scmp.eq.s32.totalorder %s18, 3
      %p79 = por %p77, %p78
      %p80 = scmp.ne.s32.totalorder %s72, %s75
      %p81 = scmp.eq.s32.totalorder %s18, 0
      %p82 = por %p80, %p81
      %p83 = scmp.ne.s32.totalorder %s72, %s75
      %p84 = scmp.eq.s32.totalorder %s23, 3
      %p85 = por %p83, %p84
      %p86 = scmp.ne.s32.totalorder %s75, %s76
      %p87 = scmp.eq.s32.totalorder %s23, 0
      %p88 = por %p86, %p87
      %p89 = scmp.ne.s32.totalorder %s75, %s76
      %p90 = scmp.eq.s32.totalorder %s24, 3
      %p91 = por %p89, %p90
      %p93 = scmp.ne.s32.totalorder %s76, %s92
      %p94 = scmp.eq.s32.totalorder %s24, 0
      %p95 = por %p93, %p94
      %s97 = sadd.s32 %s96, 1
      %p100 = scmp.eq.s32.totalorder %s18, 3
      %p101 = scmp.ne.s32.totalorder %s96, %s98
      %p102 = scmp.eq.s32.totalorder %s18, 0
      %p103 = por %p101, %p102
      %p104 = scmp.ne.s32.totalorder %s96, %s98
      %p105 = scmp.eq.s32.totalorder %s23, 3
      %p106 = por %p104, %p105
      %p107 = scmp.ne.s32.totalorder %s98, %s99
      %p108 = scmp.eq.s32.totalorder %s23, 0
      %p109 = por %p107, %p108
      %p110 = scmp.ne.s32.totalorder %s98, %s99
      %p111 = scmp.eq.s32.totalorder %s24, 3
      %p112 = por %p110, %p111
      %p114 = scmp.ne.s32.totalorder %s99, %s113
      %p115 = scmp.eq.s32.totalorder %s24, 0
      %p116 = por %p114, %p115
      %s118 = sadd.s32 %s117, 1
      %p121 = scmp.eq.s32.totalorder %s18, 3
      %p122 = scmp.ne.s32.totalorder %s117, %s119
      %p123 = scmp.eq.s32.totalorder %s18, 0
      %p124 = por %p122, %p123
      %p125 = scmp.ne.s32.totalorder %s117, %s119
      %p126 = scmp.eq.s32.totalorder %s23, 3
      %p127 = por %p125, %p126
      %p128 = scmp.ne.s32.totalorder %s119, %s120
      %p129 = scmp.eq.s32.totalorder %s23, 0
      %p130 = por %p128, %p129
      %p131 = scmp.ne.s32.totalorder %s119, %s120
      %p132 = scmp.eq.s32.totalorder %s24, 3
      %p133 = por %p131, %p132
      %p135 = scmp.ne.s32.totalorder %s120, %s134
      %p136 = scmp.eq.s32.totalorder %s24, 0
      %p137 = por %p135, %p136
      %s139 = sadd.s32 %s138, 1
      %p142 = scmp.eq.s32.totalorder %s18, 3
      %p143 = scmp.ne.s32.totalorder %s138, %s140
      %p144 = scmp.eq.s32.totalorder %s18, 0
      %p145 = por %p143, %p144
      %p146 = scmp.ne.s32.totalorder %s138, %s140
      %p147 = scmp.eq.s32.totalorder %s23, 3
      %p148 = por %p146, %p147
      %p149 = scmp.ne.s32.totalorder %s140, %s141
      %p150 = scmp.eq.s32.totalorder %s23, 0
      %p151 = por %p149, %p150
      %p152 = scmp.ne.s32.totalorder %s140, %s141
      %p153 = scmp.eq.s32.totalorder %s24, 3
      %p154 = por %p152, %p153
      %p156 = scmp.ne.s32.totalorder %s141, %s155
      %p157 = scmp.eq.s32.totalorder %s24, 0
      %p158 = por %p156, %p157
      %s160 = sadd.s32 %s159, 1
      %p163 = scmp.eq.s32.totalorder %s18, 3
      %p164 = scmp.ne.s32.totalorder %s159, %s161
      %p165 = scmp.eq.s32.totalorder %s18, 0
      %p166 = por %p164, %p165
      %p167 = scmp.ne.s32.totalorder %s159, %s161
      %p168 = scmp.eq.s32.totalorder %s23, 3
      %p169 = por %p167, %p168
      %p170 = scmp.ne.s32.totalorder %s161, %s162
      %p171 = scmp.eq.s32.totalorder %s23, 0
      %p172 = por %p170, %p171
      %p173 = scmp.ne.s32.totalorder %s161, %s162
      %p174 = scmp.eq.s32.totalorder %s24, 3
      %p175 = por %p173, %p174
      %p177 = scmp.ne.s32.totalorder %s162, %s176
      %p178 = scmp.eq.s32.totalorder %s24, 0
      %p179 = por %p177, %p178
      %s181 = sadd.s32 %s180, 1
      %p184 = scmp.eq.s32.totalorder %s18, 3
      %p185 = scmp.ne.s32.totalorder %s180, %s182
      %p186 = scmp.eq.s32.totalorder %s18, 0
      %p187 = por %p185, %p186
      %p188 = scmp.ne.s32.totalorder %s180, %s182
      %p189 = scmp.eq.s32.totalorder %s23, 3
      %p190 = por %p188, %p189
      %p191 = scmp.ne.s32.totalorder %s182, %s183
      %p192 = scmp.eq.s32.totalorder %s23, 0
      %p193 = por %p191, %p192
      %p194 = scmp.ne.s32.totalorder %s182, %s183
      %p195 = scmp.eq.s32.totalorder %s24, 3
      %p196 = por %p194, %p195
      %p198 = scmp.ne.s32.totalorder %s183, %s197
      %p199 = scmp.eq.s32.totalorder %s24, 0
      %p200 = por %p198, %p199
      %s202 = sadd.s32 %s201, 1
      %p205 = scmp.eq.s32.totalorder %s18, 3
      %p206 = scmp.ne.s32.totalorder %s201, %s203
      %p207 = scmp.eq.s32.totalorder %s18, 0
      %p208 = por %p206, %p207
      %p209 = scmp.ne.s32.totalorder %s201, %s203
      %p210 = scmp.eq.s32.totalorder %s23, 3
      %p211 = por %p209, %p210
      %p212 = scmp.ne.s32.totalorder %s203, %s204
      %p213 = scmp.eq.s32.totalorder %s23, 0
      %p214 = por %p212, %p213
      %p215 = scmp.ne.s32.totalorder %s203, %s204
      %p216 = scmp.eq.s32.totalorder %s24, 3
      %p217 = por %p215, %p216
      %p219 = scmp.ne.s32.totalorder %s204, %s218
      %p220 = scmp.eq.s32.totalorder %s24, 0
      %p221 = por %p219, %p220
      %s223 = sadd.s32 %s222, 1
      %p226 = scmp.eq.s32.totalorder %s18, 3
      %p227 = scmp.ne.s32.totalorder %s222, %s224
      %p228 = scmp.eq.s32.totalorder %s18, 0
      %p229 = por %p227, %p228
      %p230 = scmp.ne.s32.totalorder %s222, %s224
      %p231 = scmp.eq.s32.totalorder %s23, 3
      %p232 = por %p230, %p231
      %p233 = scmp.ne.s32.totalorder %s224, %s225
      %p234 = scmp.eq.s32.totalorder %s23, 0
      %p235 = por %p233, %p234
      %p236 = scmp.ne.s32.totalorder %s224, %s225
      %p237 = scmp.eq.s32.totalorder %s24, 3
      %p238 = por %p236, %p237
      %p240 = scmp.ne.s32.totalorder %s225, %s239
      %p241 = scmp.eq.s32.totalorder %s24, 0
      %p242 = por %p240, %p241
      %s243 = ssub.s32 %s25, %s37
      %s244 = ssub.s32 %s26, %s33
      %s245 = sor.u32 %s243, %s244
      %p246 = scmp.eq.s32.totalorder %s245, 0
      %s248 = sadd.s32 %s247, 1
      %s249 = scalar_select %p246, %s247, %s248
      %p252 = pneg %p246
      %p253 = scmp.eq.s32.totalorder %s18, 3
      %p254 = por %p252, %p253
      %p255 = scmp.ne.s32.totalorder %s247, %s250
      %p256 = scmp.eq.s32.totalorder %s18, 0
      %p257 = por %p255, %p256
      %p258 = scmp.ne.s32.totalorder %s247, %s250
      %p259 = scmp.eq.s32.totalorder %s23, 3
      %p260 = por %p258, %p259
      %p261 = scmp.ne.s32.totalorder %s250, %s251
      %p262 = scmp.eq.s32.totalorder %s23, 0
      %p263 = por %p261, %p262
      %p264 = scmp.ne.s32.totalorder %s250, %s251
      %p265 = scmp.eq.s32.totalorder %s24, 3
      %p266 = por %p264, %p265
      %p268 = scmp.ne.s32.totalorder %s251, %s267
      %p269 = scmp.eq.s32.totalorder %s24, 0
      %p270 = por %p268, %p269
      %p271 = scmp.le.s32.totalorder 1, %s18
      %p272 = scmp.lt.s32.totalorder %s18, 5
      %p273 = pnand %p271, %p272
      %p274 = pneg %p273
      // Predicated region
      $region9: #{tpu_custom_call.1} parent=5 // pred_check
        _
      $region10: #{tpu_custom_call.1} parent=5 // pred_check_branch
        %276 = sbr.rel (%p273) target = $region12
      $region11: #{tpu_custom_call.1} parent=5 // pred_region
        %s277 = ssub.s32 %s18, 1
        // Predicated region
        $region13: #{tpu_custom_call.1} parent=11 // pred_check
          %p278 = pneg %p109
        $region14: #{tpu_custom_call.1} parent=11 // pred_check_branch
          %280 = sbr.rel (%p278) target = $region16
        $region15: #{tpu_custom_call.1} parent=11 // pred_region
          _
        $region16: #{tpu_custom_call.1} parent=11 // pred_fallthru
          _
        // Predicated region
        $region17: #{tpu_custom_call.1} parent=11 // pred_check
          %p281 = pneg %p130
        $region18: #{tpu_custom_call.1} parent=11 // pred_check_branch
          %283 = sbr.rel (%p281) target = $region20
        $region19: #{tpu_custom_call.1} parent=11 // pred_region
          _
        $region20: #{tpu_custom_call.1} parent=11 // pred_fallthru
          _
        // Predicated region
        $region21: #{tpu_custom_call.1} parent=11 // pred_check
          %p284 = pneg %p151
        $region22: #{tpu_custom_call.1} parent=11 // pred_check_branch
          %286 = sbr.rel (%p284) target = $region24
        $region23: #{tpu_custom_call.1} parent=11 // pred_region
          _
        $region24: #{tpu_custom_call.1} parent=11 // pred_fallthru
          _
        // Predicated region
        $region25: #{tpu_custom_call.1} parent=11 // pred_check
          %p287 = pneg %p172
        $region26: #{tpu_custom_call.1} parent=11 // pred_check_branch
          %289 = sbr.rel (%p287) target = $region28
        $region27: #{tpu_custom_call.1} parent=11 // pred_region
          _
        $region28: #{tpu_custom_call.1} parent=11 // pred_fallthru
          _
        // Predicated region
        $region29: #{tpu_custom_call.1} parent=11 // pred_check
          %p290 = pneg %p193
        $region30: #{tpu_custom_call.1} parent=11 // pred_check_branch
          %292 = sbr.rel (%p290) target = $region32
        $region31: #{tpu_custom_call.1} parent=11 // pred_region
          _
        $region32: #{tpu_custom_call.1} parent=11 // pred_fallthru
          _
        // Predicated region
        $region33: #{tpu_custom_call.1} parent=11 // pred_check
          %p293 = pneg %p214
        $region34: #{tpu_custom_call.1} parent=11 // pred_check_branch
          %295 = sbr.rel (%p293) target = $region36
        $region35: #{tpu_custom_call.1} parent=11 // pred_region
          _
        $region36: #{tpu_custom_call.1} parent=11 // pred_fallthru
          _
        // Predicated region
        $region37: #{tpu_custom_call.1} parent=11 // pred_check
          %p296 = pneg %p235
        $region38: #{tpu_custom_call.1} parent=11 // pred_check_branch
          %298 = sbr.rel (%p296) target = $region40
        $region39: #{tpu_custom_call.1} parent=11 // pred_region
          _
        $region40: #{tpu_custom_call.1} parent=11 // pred_fallthru
          _
      $region12: #{tpu_custom_call.1} parent=5 // pred_fallthru
        _
      %p299 = scmp.lt.s32.totalorder %s18, 4
      // Predicated region
      $region41: #{tpu_custom_call.1} parent=5 // pred_check
        %p300 = pneg %p299
      $region42: #{tpu_custom_call.1} parent=5 // pred_check_branch
        %302 = sbr.rel (%p300) target = $region44
      $region43: #{tpu_custom_call.1} parent=5 // pred_region
        // Predicated region
        $region45: #{tpu_custom_call.1} parent=43 // pred_check
          %p303 = pneg %p52
        $region46: #{tpu_custom_call.1} parent=43 // pred_check_branch
          %305 = sbr.rel (%p303) target = $region48
        $region47: #{tpu_custom_call.1} parent=43 // pred_region
          %s306 = smul.u32 8, %s26
          %p307 = scmp.lt.s32.totalorder %s25, 1
          %s308 = scalar_select %p307, %s25, 1
          %p309 = scmp.lt.s32.totalorder %s306, 15
          %s310 = scalar_select %p309, %s306, 15
          %s311 = smul.addr %s310, 2
          %s312 = smul.addr %s308, 32
          %s313 = sadd.s32 %s311, %s312
          %s314 = smul.addr %s313, 8
          %s315 = scalar_lea.vmem %s0, %s314
          %s316 = smul.u32 8, %s26
        $region48: #{tpu_custom_call.1} parent=43 // pred_fallthru
          _
        // Predicated region
        $region49: #{tpu_custom_call.1} parent=43 // pred_check
          %p317 = pneg %p82
        $region50: #{tpu_custom_call.1} parent=43 // pred_check_branch
          %319 = sbr.rel (%p317) target = $region52
        $region51: #{tpu_custom_call.1} parent=43 // pred_region
          %s320 = smul.u32 %s25, 2
          %s321 = sadd.s32 %s320, %s26
          %p322 = scmp.lt.s32.totalorder %s321, 3
          %s323 = scalar_select %p322, %s321, 3
          %s324 = smul.addr %s323, 2
          %s325 = smul.addr %s324, 8
          %s326 = scalar_lea.vmem %s1, %s325
          %s327 = smul.u32 %s25, 2
          %s328 = sadd.s32 %s327, %s26
        $region52: #{tpu_custom_call.1} parent=43 // pred_fallthru
          _
      $region44: #{tpu_custom_call.1} parent=5 // pred_fallthru
        _
      %p329 = scmp.le.s32.totalorder 1, %s18
      %p330 = scmp.lt.s32.totalorder %s18, 5
      %p331 = pnand %p329, %p330
      %p332 = pneg %p331
      // Predicated region
      $region53: #{tpu_custom_call.1} parent=5 // pred_check
        _
      $region54: #{tpu_custom_call.1} parent=5 // pred_check_branch
        %334 = sbr.rel (%p331) target = $region56
      $region55: #{tpu_custom_call.1} parent=5 // pred_region
        %s335 = ssub.s32 %s18, 1
        %s336 = smul.u32 8, %s28
        %p337 = scmp.lt.s32.totalorder %s27, 1
        %s338 = scalar_select %p337, %s27, 1
        %p339 = scmp.lt.s32.totalorder %s336, 15
        %s340 = scalar_select %p339, %s336, 15
        %s341 = smul.addr %s340, 2
        %s342 = smul.addr %s338, 32
        %s343 = sadd.s32 %s341, %s342
        %s344 = smul.addr %s343, 8
        %s345 = scalar_lea.vmem %s0, %s344
        %p346 = pneg %p58
        %p347 = pneg %p55
        %s348 = smul.u32 %s27, 2
        %s349 = sadd.s32 %s348, %s28
        %p350 = scmp.lt.s32.totalorder %s349, 3
        %s351 = scalar_select %p350, %s349, 3
        %s352 = smul.addr %s351, 2
        %s353 = smul.addr %s352, 8
        %s354 = scalar_lea.vmem %s1, %s353
        %p355 = pneg %p88
        %p356 = pneg %p85
        %p357 = pneg %p109
        %p358 = pneg %p106
        %p359 = pneg %p130
        %p360 = pneg %p127
        %p361 = pneg %p151
        %p362 = pneg %p148
        %p363 = pneg %p172
        %p364 = pneg %p169
        %p365 = pneg %p193
        %p366 = pneg %p190
        %p367 = pneg %p214
        %p368 = pneg %p211
        %p369 = pneg %p235
        %p370 = pneg %p232
        %p371 = pneg %p263
        %p372 = pneg %p260
        %s373 = sand.u32 %s250, 1
        %s374 = scalar_lea.sflag [#allocation4], %s373
        %s375 = sand.u32 %s250, 1
        %s376 = smul.addr %s375, 8
        %s377 = scalar_lea.vmem [#allocation3], %s376
        %s378 = smul.u32 8, %s28
        %p379 = scmp.lt.s32.totalorder %s27, 1
        %s380 = scalar_select %p379, %s27, 1
        %p381 = scmp.lt.s32.totalorder %s378, 15
        %s382 = scalar_select %p381, %s378, 15
        %s383 = smul.addr %s382, 2
        %s384 = smul.addr %s380, 32
        %s385 = sadd.s32 %s383, %s384
        %s386 = smul.addr %s385, 8
        %s387 = scalar_lea.vmem %s0, %s386
        %s388 = smul.u32 8, %s28
        %s389 = smul.u32 %s27, 2
        %s390 = sadd.s32 %s389, %s28
        %p391 = scmp.lt.s32.totalorder %s390, 3
        %s392 = scalar_select %p391, %s390, 3
        %s393 = smul.addr %s392, 2
        %s394 = smul.addr %s393, 8
        %s395 = scalar_lea.vmem %s1, %s394
        %s396 = smul.u32 %s27, 2
        %s397 = sadd.s32 %s396, %s28
        %v399 = vld [vmem:[%s387] sm:$0xff]
        %v400 = vld [vmem:[%s387 + $0x8] sm:$0xff]
        %v401 = vld [vmem:[%s387 + $0x10] sm:$0xff]
        %v402 = vld [vmem:[%s387 + $0x18] sm:$0xff]
        %v403 = vld [vmem:[%s387 + $0x20] sm:$0xff]
        %v404 = vld [vmem:[%s387 + $0x28] sm:$0xff]
        %v405 = vld [vmem:[%s387 + $0x30] sm:$0xff]
        %v406 = vld [vmem:[%s387 + $0x38] sm:$0xff]
        %v407 = vld [vmem:[%s387 + $0x40] sm:$0xff]
        %v408 = vld [vmem:[%s387 + $0x48] sm:$0xff]
        %v409 = vld [vmem:[%s387 + $0x50] sm:$0xff]
        %v410 = vld [vmem:[%s387 + $0x58] sm:$0xff]
        %v411 = vld [vmem:[%s387 + $0x60] sm:$0xff]
        %v412 = vld [vmem:[%s387 + $0x68] sm:$0xff]
        %v413 = vld [vmem:[%s387 + $0x70] sm:$0xff]
        %v414 = vld [vmem:[%s387 + $0x78] sm:$0xff]
        %v415 = vpack.c.bf16 %v399, %v399
        %v416 = vpack.c.bf16 %v400, %v400
        %v417 = vpack.c.bf16 %v401, %v401
        %v418 = vpack.c.bf16 %v402, %v402
        %v419 = vpack.c.bf16 %v403, %v403
        %v420 = vpack.c.bf16 %v404, %v404
        %v421 = vpack.c.bf16 %v405, %v405
        %v422 = vpack.c.bf16 %v406, %v406
        %v423 = vpack.c.bf16 %v407, %v407
        %v424 = vpack.c.bf16 %v408, %v408
        %v425 = vpack.c.bf16 %v409, %v409
        %v426 = vpack.c.bf16 %v410, %v410
        %v427 = vpack.c.bf16 %v411, %v411
        %v428 = vpack.c.bf16 %v412, %v412
        %v429 = vpack.c.bf16 %v413, %v413
        %v430 = vpack.c.bf16 %v414, %v414
        %v431 = vld [vmem:[%s2] sm:$0xf]
        %v448 = vunpack.c.l.b16 %v415
        %v449 = vunpack.c.l.b16 %v416
        %v450 = vunpack.c.l.b16 %v417
        %v451 = vunpack.c.l.b16 %v418
        %v452 = vunpack.c.l.b16 %v419
        %v453 = vunpack.c.l.b16 %v420
        %v454 = vunpack.c.l.b16 %v421
        %v455 = vunpack.c.l.b16 %v422
        %v456 = vunpack.c.l.b16 %v423
        %v457 = vunpack.c.l.b16 %v424
        %v458 = vunpack.c.l.b16 %v425
        %v459 = vunpack.c.l.b16 %v426
        %v460 = vunpack.c.l.b16 %v427
        %v461 = vunpack.c.l.b16 %v428
        %v462 = vunpack.c.l.b16 %v429
        %v463 = vunpack.c.l.b16 %v430
        %v464 = vpack.c.b16 %v449, %v448
        %v465 = vpack.c.b16 %v451, %v450
        %v466 = vpack.c.b16 %v453, %v452
        %v467 = vpack.c.b16 %v455, %v454
        %v468 = vpack.c.b16 %v457, %v456
        %v469 = vpack.c.b16 %v459, %v458
        %v470 = vpack.c.b16 %v461, %v460
        %v471 = vpack.c.b16 %v463, %v462
        %vm472 = vcmask 64512
        %v474 = vsel %vm472, %v464, 0
        %v477 = vsel %vm472, %v465, 0
        %v480 = vsel %vm472, %v466, 0
        %v483 = vsel %vm472, %v467, 0
        %v486 = vsel %vm472, %v468, 0
        %v489 = vsel %vm472, %v469, 0
        %v492 = vsel %vm472, %v470, 0
        %v495 = vsel %vm472, %v471, 0
        %vm497 = vcmask 1043456
        %v499 = vsel %vm497, %v431, 0
        %501 = vmatpush.bf16.msra.mxu0 0
        %502 = vmatpush.bf16.msra.mxu0 0
        %503 = vmatpush.bf16.msra.mxu0 0
        %504 = vmatpush.bf16.msra.mxu0 0
        %505 = vmatpush.bf16.msra.mxu0 0
        %506 = vmatpush.bf16.msra.mxu0 0
        %507 = vmatpush.bf16.msra.mxu0 0
        %508 = vmatpush.bf16.msra.mxu0 %v499
        %509 = vmatmul.bf16.gmra.mxu0 %v474
        %v510 = vpop.f32.mrf.mxu0
        %v511 = vadd.f32 0.0, %v510
        %v512 = vpop.f32.mrf.mxu0
        %v513 = vadd.f32 0.0, %v512
        %514 = vmatmul.bf16.gmra.mxu0 %v477
        %v515 = vpop.f32.mrf.mxu0
        %v516 = vadd.f32 0.0, %v515
        %v517 = vpop.f32.mrf.mxu0
        %v518 = vadd.f32 0.0, %v517
        %519 = vmatmul.bf16.gmra.mxu0 %v480
        %v520 = vpop.f32.mrf.mxu0
        %v521 = vadd.f32 0.0, %v520
        %v522 = vpop.f32.mrf.mxu0
        %v523 = vadd.f32 0.0, %v522
        %524 = vmatmul.bf16.gmra.mxu0 %v483
        %v525 = vpop.f32.mrf.mxu0
        %v526 = vadd.f32 0.0, %v525
        %v527 = vpop.f32.mrf.mxu0
        %v528 = vadd.f32 0.0, %v527
        %529 = vmatmul.bf16.gmra.mxu0 %v486
        %v530 = vpop.f32.mrf.mxu0
        %v531 = vadd.f32 0.0, %v530
        %v532 = vpop.f32.mrf.mxu0
        %v533 = vadd.f32 0.0, %v532
        %534 = vmatmul.bf16.gmra.mxu0 %v489
        %v535 = vpop.f32.mrf.mxu0
        %v536 = vadd.f32 0.0, %v535
        %v537 = vpop.f32.mrf.mxu0
        %v538 = vadd.f32 0.0, %v537
        %539 = vmatmul.bf16.gmra.mxu0 %v492
        %v540 = vpop.f32.mrf.mxu0
        %v541 = vadd.f32 0.0, %v540
        %v542 = vpop.f32.mrf.mxu0
        %v543 = vadd.f32 0.0, %v542
        %544 = vmatmul.bf16.gmra.mxu0 %v495
        %v545 = vpop.f32.mrf.mxu0
        %v546 = vadd.f32 0.0, %v545
        %v547 = vpop.f32.mrf.mxu0
        %v548 = vadd.f32 0.0, %v547
        %549 = vdwg.mxu0
        %v550 = vpack.c.bf16 %v511, %v511
        %v551 = vpack.c.bf16 %v513, %v513
        %v552 = vpack.c.bf16 %v516, %v516
        %v553 = vpack.c.bf16 %v518, %v518
        %v554 = vpack.c.bf16 %v521, %v521
        %v555 = vpack.c.bf16 %v523, %v523
        %v556 = vpack.c.bf16 %v526, %v526
        %v557 = vpack.c.bf16 %v528, %v528
        %v558 = vpack.c.bf16 %v531, %v531
        %v559 = vpack.c.bf16 %v533, %v533
        %v560 = vpack.c.bf16 %v536, %v536
        %v561 = vpack.c.bf16 %v538, %v538
        %v562 = vpack.c.bf16 %v541, %v541
        %v563 = vpack.c.bf16 %v543, %v543
        %v564 = vpack.c.bf16 %v546, %v546
        %v565 = vpack.c.bf16 %v548, %v548
        %vm566 = vsmask.f32 256
        %vm567 = vsmask.f32 4368
        %vm568 = vmor %vm566, %vm567
        %v570 = vshrl.u32 %v550, 16
        %v572 = vrot.slane %v570, 7
        %v573 = vshll.u32 %v550, 16
        %v575 = vor.u32 %v572, %v573
        %v576 = vrot.slane %v572, 4
        %v578 = vshrl.u32 %v551, 16
        %v580 = vrot.slane %v578, 7
        %v581 = vshll.u32 %v551, 16
        %v583 = vor.u32 %v580, %v581
        %v584 = vsel %vm568, %v576, %v583
        %v585 = vrot.slane %v580, 4
        %v587 = vshrl.u32 %v552, 16
        %v589 = vrot.slane %v587, 7
        %v590 = vshll.u32 %v552, 16
        %v592 = vor.u32 %v589, %v590
        %v593 = vrot.slane %v589, 4
        %v595 = vshrl.u32 %v553, 16
        %v597 = vrot.slane %v595, 7
        %v598 = vshll.u32 %v553, 16
        %v600 = vor.u32 %v597, %v598
        %v601 = vsel %vm568, %v593, %v600
        %v602 = vrot.slane %v597, 4
        %v604 = vshrl.u32 %v554, 16
        %v606 = vrot.slane %v604, 7
        %v607 = vshll.u32 %v554, 16
        %v609 = vor.u32 %v606, %v607
        %v610 = vrot.slane %v606, 4
        %v612 = vshrl.u32 %v555, 16
        %v614 = vrot.slane %v612, 7
        %v615 = vshll.u32 %v555, 16
        %v617 = vor.u32 %v614, %v615
        %v618 = vsel %vm568, %v610, %v617
        %v619 = vrot.slane %v614, 4
        %v621 = vshrl.u32 %v556, 16
        %v623 = vrot.slane %v621, 7
        %v624 = vshll.u32 %v556, 16
        %v626 = vor.u32 %v623, %v624
        %v627 = vrot.slane %v623, 4
        %v629 = vshrl.u32 %v557, 16
        %v631 = vrot.slane %v629, 7
        %v632 = vshll.u32 %v557, 16
        %v634 = vor.u32 %v631, %v632
        %v635 = vsel %vm568, %v627, %v634
        %v636 = vrot.slane %v631, 4
        %v638 = vshrl.u32 %v558, 16
        %v640 = vrot.slane %v638, 7
        %v641 = vshll.u32 %v558, 16
        %v643 = vor.u32 %v640, %v641
        %v644 = vrot.slane %v640, 4
        %v646 = vshrl.u32 %v559, 16
        %v648 = vrot.slane %v646, 7
        %v649 = vshll.u32 %v559, 16
        %v651 = vor.u32 %v648, %v649
        %v652 = vsel %vm568, %v644, %v651
        %v653 = vrot.slane %v648, 4
        %v655 = vshrl.u32 %v560, 16
        %v657 = vrot.slane %v655, 7
        %v658 = vshll.u32 %v560, 16
        %v660 = vor.u32 %v657, %v658
        %v661 = vrot.slane %v657, 4
        %v663 = vshrl.u32 %v561, 16
        %v665 = vrot.slane %v663, 7
        %v666 = vshll.u32 %v561, 16
        %v668 = vor.u32 %v665, %v666
        %v669 = vsel %vm568, %v661, %v668
        %v670 = vrot.slane %v665, 4
        %v672 = vshrl.u32 %v562, 16
        %v674 = vrot.slane %v672, 7
        %v675 = vshll.u32 %v562, 16
        %v677 = vor.u32 %v674, %v675
        %v678 = vrot.slane %v674, 4
        %v680 = vshrl.u32 %v563, 16
        %v682 = vrot.slane %v680, 7
        %v683 = vshll.u32 %v563, 16
        %v685 = vor.u32 %v682, %v683
        %v686 = vsel %vm568, %v678, %v685
        %v687 = vrot.slane %v682, 4
        %v689 = vshrl.u32 %v564, 16
        %v691 = vrot.slane %v689, 7
        %v692 = vshll.u32 %v564, 16
        %v694 = vor.u32 %v691, %v692
        %v695 = vrot.slane %v691, 4
        %v697 = vshrl.u32 %v565, 16
        %v699 = vrot.slane %v697, 7
        %v700 = vshll.u32 %v565, 16
        %v702 = vor.u32 %v699, %v700
        %v703 = vsel %vm568, %v695, %v702
        %v704 = vrot.slane %v699, 4
        %s729 = scalar_lea.vmem [#allocation2], 12
        %vm730 = vcmask 60416
        %vm731 = vsmask.f32 7938
        %vm732 = vmand %vm730, %vm731
        %v733 = vld [vmem:[%s729] sm:$0xf]
        %v734 = vsel %vm732, %v575, %v733
        %735 = vst [vmem:[%s729] sm:$0xf] %v734
        %vm736 = vcmask 60416
        %737 = vst.msk [vmem:[%s729 + $0x4] sm:$0xf] %vm736, %v584
        %vm738 = vcmask 57344
        %vm739 = vmand %vm738, %vm566
        %v740 = vld [vmem:[%s729 + $0x8] sm:$0x1]
        %v741 = vsel %vm739, %v585, %v740
        %742 = vst [vmem:[%s729 + $0x8] sm:$0x1] %v741
        %v743 = vld [vmem:[%s729 + $0xc] sm:$0xf]
        %v744 = vsel %vm732, %v592, %v743
        %745 = vst [vmem:[%s729 + $0xc] sm:$0xf] %v744
        %746 = vst.msk [vmem:[%s729 + $0x10] sm:$0xf] %vm736, %v601
        %v747 = vld [vmem:[%s729 + $0x14] sm:$0x1]
        %v748 = vsel %vm739, %v602, %v747
        %749 = vst [vmem:[%s729 + $0x14] sm:$0x1] %v748
        %v750 = vld [vmem:[%s729 + $0x18] sm:$0xf]
        %v751 = vsel %vm732, %v609, %v750
        %752 = vst [vmem:[%s729 + $0x18] sm:$0xf] %v751
        %753 = vst.msk [vmem:[%s729 + $0x1c] sm:$0xf] %vm736, %v618
        %v754 = vld [vmem:[%s729 + $0x20] sm:$0x1]
        %v755 = vsel %vm739, %v619, %v754
        %756 = vst [vmem:[%s729 + $0x20] sm:$0x1] %v755
        %v757 = vld [vmem:[%s729 + $0x24] sm:$0xf]
        %v758 = vsel %vm732, %v626, %v757
        %759 = vst [vmem:[%s729 + $0x24] sm:$0xf] %v758
        %760 = vst.msk [vmem:[%s729 + $0x28] sm:$0xf] %vm736, %v635
        %v761 = vld [vmem:[%s729 + $0x2c] sm:$0x1]
        %v762 = vsel %vm739, %v636, %v761
        %763 = vst [vmem:[%s729 + $0x2c] sm:$0x1] %v762
        %v764 = vld [vmem:[%s729 + $0x30] sm:$0xf]
        %v765 = vsel %vm732, %v643, %v764
        %766 = vst [vmem:[%s729 + $0x30] sm:$0xf] %v765
        %767 = vst.msk [vmem:[%s729 + $0x34] sm:$0xf] %vm736, %v652
        %v768 = vld [vmem:[%s729 + $0x38] sm:$0x1]
        %v769 = vsel %vm739, %v653, %v768
        %770 = vst [vmem:[%s729 + $0x38] sm:$0x1] %v769
        %v771 = vld [vmem:[%s729 + $0x3c] sm:$0xf]
        %v772 = vsel %vm732, %v660, %v771
        %773 = vst [vmem:[%s729 + $0x3c] sm:$0xf] %v772
        %774 = vst.msk [vmem:[%s729 + $0x40] sm:$0xf] %vm736, %v669
        %v775 = vld [vmem:[%s729 + $0x44] sm:$0x1]
        %v776 = vsel %vm739, %v670, %v775
        %777 = vst [vmem:[%s729 + $0x44] sm:$0x1] %v776
        %v778 = vld [vmem:[%s729 + $0x48] sm:$0xf]
        %v779 = vsel %vm732, %v677, %v778
        %780 = vst [vmem:[%s729 + $0x48] sm:$0xf] %v779
        %781 = vst.msk [vmem:[%s729 + $0x4c] sm:$0xf] %vm736, %v686
        %v782 = vld [vmem:[%s729 + $0x50] sm:$0x1]
        %v783 = vsel %vm739, %v687, %v782
        %784 = vst [vmem:[%s729 + $0x50] sm:$0x1] %v783
        %v785 = vld [vmem:[%s729 + $0x54] sm:$0xf]
        %v786 = vsel %vm732, %v694, %v785
        %787 = vst [vmem:[%s729 + $0x54] sm:$0xf] %v786
        %788 = vst.msk [vmem:[%s729 + $0x58] sm:$0xf] %vm736, %v703
        %v789 = vld [vmem:[%s729 + $0x5c] sm:$0x1]
        %v790 = vsel %vm739, %v704, %v789
        %791 = vst [vmem:[%s729 + $0x5c] sm:$0x1] %v790
        %v792 = vld [vmem:[%s395] sm:$0xff]
        %v793 = vld [vmem:[%s395 + $0x8] sm:$0xff]
        %v794 = vpack.c.bf16 %v792, %v792
        %v795 = vpack.c.bf16 %v793, %v793
        %v796 = vld [vmem:[%s2] sm:$0xf]
        %v799 = vunpack.c.l.b16 %v794
        %v800 = vunpack.c.l.b16 %v795
        %v801 = vpack.c.b16 %v800, %v799
        %v803 = vsel %vm472, %v801, 0
        %v806 = vsel %vm497, %v796, 0
        %808 = vmatpush.bf16.msra.mxu0 0
        %809 = vmatpush.bf16.msra.mxu0 0
        %810 = vmatpush.bf16.msra.mxu0 0
        %811 = vmatpush.bf16.msra.mxu0 0
        %812 = vmatpush.bf16.msra.mxu0 0
        %813 = vmatpush.bf16.msra.mxu0 0
        %814 = vmatpush.bf16.msra.mxu0 0
        %815 = vmatpush.bf16.msra.mxu0 %v806
        %816 = vmatmul.bf16.gmra.mxu0 %v803
        %v817 = vpop.f32.mrf.mxu0
        %v818 = vadd.f32 0.0, %v817
        %v819 = vpop.f32.mrf.mxu0
        %v820 = vadd.f32 0.0, %v819
        %821 = vdwg.mxu0
        %v822 = vpack.c.bf16 %v818, %v818
        %v823 = vpack.c.bf16 %v820, %v820
        %v825 = vshrl.u32 %v822, 16
        %v827 = vrot.slane %v825, 7
        %v828 = vshll.u32 %v822, 16
        %v830 = vor.u32 %v827, %v828
        %v831 = vrot.slane %v827, 4
        %v833 = vshrl.u32 %v823, 16
        %v835 = vrot.slane %v833, 7
        %v836 = vshll.u32 %v823, 16
        %v838 = vor.u32 %v835, %v836
        %v839 = vsel %vm568, %v831, %v838
        %v840 = vrot.slane %v835, 4
        %v844 = vld [vmem:[#allocation2] sm:$0xf]
        %v845 = vsel %vm732, %v830, %v844
        %846 = vst [vmem:[#allocation2] sm:$0xf] %v845
        %847 = vst.msk [vmem:[#allocation2 + $0x4] sm:$0xf] %vm736, %v839
        %v848 = vld [vmem:[#allocation2 + $0x8] sm:$0x1]
        %v849 = vsel %vm739, %v840, %v848
        %850 = vst [vmem:[#allocation2 + $0x8] sm:$0x1] %v849
        %v851 = vld [vmem:[#allocation2] sm:$0x1]
        %v852 = vsel %vm739, 0, %v851
        %853 = vst [vmem:[#allocation2] sm:$0x1] %v852
        %v854 = vld [vmem:[#allocation2 + $0xc] sm:$0x1]
        %v855 = vsel %vm739, 0, %v854
        %856 = vst [vmem:[#allocation2 + $0xc] sm:$0x1] %v855
        %v857 = vld [vmem:[#allocation2 + $0x18] sm:$0x1]
        %v858 = vsel %vm739, 0, %v857
        %859 = vst [vmem:[#allocation2 + $0x18] sm:$0x1] %v858
        %v860 = vld [vmem:[#allocation2 + $0x24] sm:$0x1]
        %v861 = vsel %vm739, 0, %v860
        %862 = vst [vmem:[#allocation2 + $0x24] sm:$0x1] %v861
        %v863 = vld [vmem:[#allocation2 + $0x30] sm:$0x1]
        %v864 = vsel %vm739, 0, %v863
        %865 = vst [vmem:[#allocation2 + $0x30] sm:$0x1] %v864
        %v866 = vld [vmem:[#allocation2 + $0x3c] sm:$0x1]
        %v867 = vsel %vm739, 0, %v866
        %868 = vst [vmem:[#allocation2 + $0x3c] sm:$0x1] %v867
        %v869 = vld [vmem:[#allocation2 + $0x48] sm:$0x1]
        %v870 = vsel %vm739, 0, %v869
        %871 = vst [vmem:[#allocation2 + $0x48] sm:$0x1] %v870
        %v872 = vld [vmem:[#allocation2 + $0x54] sm:$0x1]
        %v873 = vsel %vm739, 0, %v872
        %874 = vst [vmem:[#allocation2 + $0x54] sm:$0x1] %v873
        %v875 = vld [vmem:[#allocation2 + $0x60] sm:$0x1]
        %v876 = vsel %vm739, 0, %v875
        %877 = vst [vmem:[#allocation2 + $0x60] sm:$0x1] %v876
        %vm878 = vmand %vm738, %vm731
        %v879 = vld [vmem:[#allocation2 + $0x8] sm:$0x1]
        %v880 = vsel %vm878, 0, %v879
        %881 = vst [vmem:[#allocation2 + $0x8] sm:$0x1] %v880
        %v882 = vld [vmem:[#allocation2 + $0x14] sm:$0x1]
        %v883 = vsel %vm878, 0, %v882
        %884 = vst [vmem:[#allocation2 + $0x14] sm:$0x1] %v883
        %v885 = vld [vmem:[#allocation2 + $0x20] sm:$0x1]
        %v886 = vsel %vm878, 0, %v885
        %887 = vst [vmem:[#allocation2 + $0x20] sm:$0x1] %v886
        %v888 = vld [vmem:[#allocation2 + $0x2c] sm:$0x1]
        %v889 = vsel %vm878, 0, %v888
        %890 = vst [vmem:[#allocation2 + $0x2c] sm:$0x1] %v889
        %v891 = vld [vmem:[#allocation2 + $0x38] sm:$0x1]
        %v892 = vsel %vm878, 0, %v891
        %893 = vst [vmem:[#allocation2 + $0x38] sm:$0x1] %v892
        %v894 = vld [vmem:[#allocation2 + $0x44] sm:$0x1]
        %v895 = vsel %vm878, 0, %v894
        %896 = vst [vmem:[#allocation2 + $0x44] sm:$0x1] %v895
        %v897 = vld [vmem:[#allocation2 + $0x50] sm:$0x1]
        %v898 = vsel %vm878, 0, %v897
        %899 = vst [vmem:[#allocation2 + $0x50] sm:$0x1] %v898
        %v900 = vld [vmem:[#allocation2 + $0x5c] sm:$0x1]
        %v901 = vsel %vm878, 0, %v900
        %902 = vst [vmem:[#allocation2 + $0x5c] sm:$0x1] %v901
        %v903 = vld [vmem:[#allocation2 + $0x68] sm:$0x1]
        %v904 = vsel %vm878, 0, %v903
        %905 = vst [vmem:[#allocation2 + $0x68] sm:$0x1] %v904
        %v906 = vld [vmem:[#allocation2] sm:$0xf]
        %v907 = vld [vmem:[#allocation2 + $0x4] sm:$0xf]
        %v908 = vld [vmem:[#allocation2 + $0xc] sm:$0xf]
        %v909 = vld [vmem:[#allocation2 + $0x10] sm:$0xf]
        %v910 = vld [vmem:[#allocation2 + $0x18] sm:$0xf]
        %v911 = vld [vmem:[#allocation2 + $0x1c] sm:$0xf]
        %v912 = vld [vmem:[#allocation2 + $0x24] sm:$0xf]
        %v913 = vld [vmem:[#allocation2 + $0x28] sm:$0xf]
        %v914 = vld [vmem:[#allocation2 + $0x30] sm:$0xf]
        %v915 = vld [vmem:[#allocation2 + $0x34] sm:$0xf]
        %v916 = vld [vmem:[#allocation2 + $0x3c] sm:$0xf]
        %v917 = vld [vmem:[#allocation2 + $0x40] sm:$0xf]
        %v918 = vld [vmem:[#allocation2 + $0x48] sm:$0xf]
        %v919 = vld [vmem:[#allocation2 + $0x4c] sm:$0xf]
        %v920 = vld [vmem:[#allocation2 + $0x54] sm:$0xf]
        %v921 = vld [vmem:[#allocation2 + $0x58] sm:$0xf]
        %v922 = vld [vmem:[%s3] sm:$0xf]
        %v923 = vld [vmem:[#allocation2 + $0x8] sm:$0x1]
        %v924 = vld [vmem:[#allocation2 + $0x14] sm:$0x1]
        %v925 = vld [vmem:[#allocation2 + $0x20] sm:$0x1]
        %v926 = vld [vmem:[#allocation2 + $0x2c] sm:$0x1]
        %v927 = vld [vmem:[#allocation2 + $0x38] sm:$0x1]
        %v928 = vld [vmem:[#allocation2 + $0x44] sm:$0x1]
        %v929 = vld [vmem:[#allocation2 + $0x50] sm:$0x1]
        %v930 = vld [vmem:[#allocation2 + $0x5c] sm:$0x1]
        %s931 = scalar_lea.vmem %s3, 4
        %v932 = vld [vmem:[%s931] sm:$0xf]
        %vm933 = vsmask.f32 3328
        %vm934 = vsmask.f32 7440
        %vm935 = vmor %vm933, %vm934
        %v937 = vshrl.u32 %v906, 16
        %v939 = vrot.slane %v937, 4
        %v940 = vshll.u32 %v906, 16
        %v942 = vrot.slane %v940, 5
        %v943 = vor.u32 %v939, %v942
        %v944 = vrot.slane %v943, 4
        %v946 = vshll.u32 %v907, 16
        %v948 = vrot.slane %v946, 5
        %v949 = vsel %vm935, %v944, %v948
        %v950 = vshrl.u32 %v907, 16
        %v952 = vrot.slane %v950, 4
        %v953 = vor.u32 %v952, %v948
        %v954 = vrot.slane %v953, 4
        %v956 = vshll.u32 %v923, 16
        %v958 = vrot.slane %v956, 5
        %v959 = vsel %vm935, %v954, %v958
        %v961 = vshrl.u32 %v908, 16
        %v963 = vrot.slane %v961, 4
        %v964 = vshll.u32 %v908, 16
        %v966 = vrot.slane %v964, 5
        %v967 = vor.u32 %v963, %v966
        %v968 = vrot.slane %v967, 4
        %v970 = vshll.u32 %v909, 16
        %v972 = vrot.slane %v970, 5
        %v973 = vsel %vm935, %v968, %v972
        %v974 = vshrl.u32 %v909, 16
        %v976 = vrot.slane %v974, 4
        %v977 = vor.u32 %v976, %v972
        %v978 = vrot.slane %v977, 4
        %v980 = vshll.u32 %v924, 16
        %v982 = vrot.slane %v980, 5
        %v983 = vsel %vm935, %v978, %v982
        %v985 = vshrl.u32 %v910, 16
        %v987 = vrot.slane %v985, 4
        %v988 = vshll.u32 %v910, 16
        %v990 = vrot.slane %v988, 5
        %v991 = vor.u32 %v987, %v990
        %v992 = vrot.slane %v991, 4
        %v994 = vshll.u32 %v911, 16
        %v996 = vrot.slane %v994, 5
        %v997 = vsel %vm935, %v992, %v996
        %v998 = vshrl.u32 %v911, 16
        %v1000 = vrot.slane %v998, 4
        %v1001 = vor.u32 %v1000, %v996
        %v1002 = vrot.slane %v1001, 4
        %v1004 = vshll.u32 %v925, 16
        %v1006 = vrot.slane %v1004, 5
        %v1007 = vsel %vm935, %v1002, %v1006
        %v1009 = vshrl.u32 %v912, 16
        %v1011 = vrot.slane %v1009, 4
        %v1012 = vshll.u32 %v912, 16
        %v1014 = vrot.slane %v1012, 5
        %v1015 = vor.u32 %v1011, %v1014
        %v1016 = vrot.slane %v1015, 4
        %v1018 = vshll.u32 %v913, 16
        %v1020 = vrot.slane %v1018, 5
        %v1021 = vsel %vm935, %v1016, %v1020
        %v1022 = vshrl.u32 %v913, 16
        %v1024 = vrot.slane %v1022, 4
        %v1025 = vor.u32 %v1024, %v1020
        %v1026 = vrot.slane %v1025, 4
        %v1028 = vshll.u32 %v926, 16
        %v1030 = vrot.slane %v1028, 5
        %v1031 = vsel %vm935, %v1026, %v1030
        %v1033 = vshrl.u32 %v914, 16
        %v1035 = vrot.slane %v1033, 4
        %v1036 = vshll.u32 %v914, 16
        %v1038 = vrot.slane %v1036, 5
        %v1039 = vor.u32 %v1035, %v1038
        %v1040 = vrot.slane %v1039, 4
        %v1042 = vshll.u32 %v915, 16
        %v1044 = vrot.slane %v1042, 5
        %v1045 = vsel %vm935, %v1040, %v1044
        %v1046 = vshrl.u32 %v915, 16
        %v1048 = vrot.slane %v1046, 4
        %v1049 = vor.u32 %v1048, %v1044
        %v1050 = vrot.slane %v1049, 4
        %v1052 = vshll.u32 %v927, 16
        %v1054 = vrot.slane %v1052, 5
        %v1055 = vsel %vm935, %v1050, %v1054
        %v1057 = vshrl.u32 %v916, 16
        %v1059 = vrot.slane %v1057, 4
        %v1060 = vshll.u32 %v916, 16
        %v1062 = vrot.slane %v1060, 5
        %v1063 = vor.u32 %v1059, %v1062
        %v1064 = vrot.slane %v1063, 4
        %v1066 = vshll.u32 %v917, 16
        %v1068 = vrot.slane %v1066, 5
        %v1069 = vsel %vm935, %v1064, %v1068
        %v1070 = vshrl.u32 %v917, 16
        %v1072 = vrot.slane %v1070, 4
        %v1073 = vor.u32 %v1072, %v1068
        %v1074 = vrot.slane %v1073, 4
        %v1076 = vshll.u32 %v928, 16
        %v1078 = vrot.slane %v1076, 5
        %v1079 = vsel %vm935, %v1074, %v1078
        %v1081 = vshrl.u32 %v918, 16
        %v1083 = vrot.slane %v1081, 4
        %v1084 = vshll.u32 %v918, 16
        %v1086 = vrot.slane %v1084, 5
        %v1087 = vor.u32 %v1083, %v1086
        %v1088 = vrot.slane %v1087, 4
        %v1090 = vshll.u32 %v919, 16
        %v1092 = vrot.slane %v1090, 5
        %v1093 = vsel %vm935, %v1088, %v1092
        %v1094 = vshrl.u32 %v919, 16
        %v1096 = vrot.slane %v1094, 4
        %v1097 = vor.u32 %v1096, %v1092
        %v1098 = vrot.slane %v1097, 4
        %v1100 = vshll.u32 %v929, 16
        %v1102 = vrot.slane %v1100, 5
        %v1103 = vsel %vm935, %v1098, %v1102
        %v1105 = vshrl.u32 %v920, 16
        %v1107 = vrot.slane %v1105, 4
        %v1108 = vshll.u32 %v920, 16
        %v1110 = vrot.slane %v1108, 5
        %v1111 = vor.u32 %v1107, %v1110
        %v1112 = vrot.slane %v1111, 4
        %v1114 = vshll.u32 %v921, 16
        %v1116 = vrot.slane %v1114, 5
        %v1117 = vsel %vm935, %v1112, %v1116
        %v1118 = vshrl.u32 %v921, 16
        %v1120 = vrot.slane %v1118, 4
        %v1121 = vor.u32 %v1120, %v1116
        %v1122 = vrot.slane %v1121, 4
        %v1124 = vshll.u32 %v930, 16
        %v1126 = vrot.slane %v1124, 5
        %v1127 = vsel %vm935, %v1122, %v1126
        %v1128 = vunpack.c.l.b16 %v949
        %v1129 = vunpack.c.l.b16 %v959
        %v1130 = vunpack.c.l.b16 %v973
        %v1131 = vunpack.c.l.b16 %v983
        %v1132 = vunpack.c.l.b16 %v997
        %v1133 = vunpack.c.l.b16 %v1007
        %v1134 = vunpack.c.l.b16 %v1021
        %v1135 = vunpack.c.l.b16 %v1031
        %v1136 = vunpack.c.l.b16 %v1045
        %v1137 = vunpack.c.l.b16 %v1055
        %v1138 = vunpack.c.l.b16 %v1069
        %v1139 = vunpack.c.l.b16 %v1079
        %v1140 = vunpack.c.l.b16 %v1093
        %v1141 = vunpack.c.l.b16 %v1103
        %v1142 = vunpack.c.l.b16 %v1117
        %v1143 = vunpack.c.l.b16 %v1127
        %v1144 = vpack.c.b16 %v1129, %v1128
        %v1145 = vpack.c.b16 %v1131, %v1130
        %v1146 = vpack.c.b16 %v1133, %v1132
        %v1147 = vpack.c.b16 %v1135, %v1134
        %v1148 = vpack.c.b16 %v1137, %v1136
        %v1149 = vpack.c.b16 %v1139, %v1138
        %v1150 = vpack.c.b16 %v1141, %v1140
        %v1151 = vpack.c.b16 %v1143, %v1142
        %v1153 = vsel %vm472, %v1144, 0
        %v1156 = vsel %vm472, %v1145, 0
        %v1159 = vsel %vm472, %v1146, 0
        %v1162 = vsel %vm472, %v1147, 0
        %v1165 = vsel %vm472, %v1148, 0
        %v1168 = vsel %vm472, %v1149, 0
        %v1171 = vsel %vm472, %v1150, 0
        %v1174 = vsel %vm472, %v1151, 0
        %v1177 = vsel %vm497, %v932, 0
        %1179 = vmatpush.bf16.msra.mxu0 0
        %1180 = vmatpush.bf16.msra.mxu0 0
        %1181 = vmatpush.bf16.msra.mxu0 0
        %1182 = vmatpush.bf16.msra.mxu0 0
        %1183 = vmatpush.bf16.msra.mxu0 0
        %1184 = vmatpush.bf16.msra.mxu0 0
        %1185 = vmatpush.bf16.msra.mxu0 0
        %1186 = vmatpush.bf16.msra.mxu0 %v1177
        %1187 = vmatmul.bf16.gmra.mxu0 %v1153
        %v1188 = vpop.f32.mrf.mxu0
        %v1189 = vadd.f32 0.0, %v1188
        %v1190 = vpop.f32.mrf.mxu0
        %v1191 = vadd.f32 0.0, %v1190
        %1192 = vmatmul.bf16.gmra.mxu0 %v1156
        %v1193 = vpop.f32.mrf.mxu0
        %v1194 = vadd.f32 0.0, %v1193
        %v1195 = vpop.f32.mrf.mxu0
        %v1196 = vadd.f32 0.0, %v1195
        %1197 = vmatmul.bf16.gmra.mxu0 %v1159
        %v1198 = vpop.f32.mrf.mxu0
        %v1199 = vadd.f32 0.0, %v1198
        %v1200 = vpop.f32.mrf.mxu0
        %v1201 = vadd.f32 0.0, %v1200
        %1202 = vmatmul.bf16.gmra.mxu0 %v1162
        %v1203 = vpop.f32.mrf.mxu0
        %v1204 = vadd.f32 0.0, %v1203
        %v1205 = vpop.f32.mrf.mxu0
        %v1206 = vadd.f32 0.0, %v1205
        %1207 = vmatmul.bf16.gmra.mxu0 %v1165
        %v1208 = vpop.f32.mrf.mxu0
        %v1209 = vadd.f32 0.0, %v1208
        %v1210 = vpop.f32.mrf.mxu0
        %v1211 = vadd.f32 0.0, %v1210
        %1212 = vmatmul.bf16.gmra.mxu0 %v1168
        %v1213 = vpop.f32.mrf.mxu0
        %v1214 = vadd.f32 0.0, %v1213
        %v1215 = vpop.f32.mrf.mxu0
        %v1216 = vadd.f32 0.0, %v1215
        %1217 = vmatmul.bf16.gmra.mxu0 %v1171
        %v1218 = vpop.f32.mrf.mxu0
        %v1219 = vadd.f32 0.0, %v1218
        %v1220 = vpop.f32.mrf.mxu0
        %v1221 = vadd.f32 0.0, %v1220
        %1222 = vmatmul.bf16.gmra.mxu0 %v1174
        %v1223 = vpop.f32.mrf.mxu0
        %v1224 = vadd.f32 0.0, %v1223
        %v1225 = vpop.f32.mrf.mxu0
        %v1226 = vadd.f32 0.0, %v1225
        %1227 = vdwg.mxu0
        %v1244 = vunpack.c.l.b16 %v906
        %v1245 = vunpack.c.l.b16 %v907
        %v1246 = vunpack.c.l.b16 %v908
        %v1247 = vunpack.c.l.b16 %v909
        %v1248 = vunpack.c.l.b16 %v910
        %v1249 = vunpack.c.l.b16 %v911
        %v1250 = vunpack.c.l.b16 %v912
        %v1251 = vunpack.c.l.b16 %v913
        %v1252 = vunpack.c.l.b16 %v914
        %v1253 = vunpack.c.l.b16 %v915
        %v1254 = vunpack.c.l.b16 %v916
        %v1255 = vunpack.c.l.b16 %v917
        %v1256 = vunpack.c.l.b16 %v918
        %v1257 = vunpack.c.l.b16 %v919
        %v1258 = vunpack.c.l.b16 %v920
        %v1259 = vunpack.c.l.b16 %v921
        %v1260 = vpack.c.b16 %v1245, %v1244
        %v1261 = vpack.c.b16 %v1247, %v1246
        %v1262 = vpack.c.b16 %v1249, %v1248
        %v1263 = vpack.c.b16 %v1251, %v1250
        %v1264 = vpack.c.b16 %v1253, %v1252
        %v1265 = vpack.c.b16 %v1255, %v1254
        %v1266 = vpack.c.b16 %v1257, %v1256
        %v1267 = vpack.c.b16 %v1259, %v1258
        %v1269 = vsel %vm472, %v1260, 0
        %v1272 = vsel %vm472, %v1261, 0
        %v1275 = vsel %vm472, %v1262, 0
        %v1278 = vsel %vm472, %v1263, 0
        %v1281 = vsel %vm472, %v1264, 0
        %v1284 = vsel %vm472, %v1265, 0
        %v1287 = vsel %vm472, %v1266, 0
        %v1290 = vsel %vm472, %v1267, 0
        %v1293 = vsel %vm497, %v922, 0
        %1295 = vmatpush.bf16.msra.mxu0 0
        %1296 = vmatpush.bf16.msra.mxu0 0
        %1297 = vmatpush.bf16.msra.mxu0 0
        %1298 = vmatpush.bf16.msra.mxu0 0
        %1299 = vmatpush.bf16.msra.mxu0 0
        %1300 = vmatpush.bf16.msra.mxu0 0
        %1301 = vmatpush.bf16.msra.mxu0 0
        %1302 = vmatpush.bf16.msra.mxu0 %v1293
        %1303 = vmatmul.bf16.gmra.mxu0 %v1269
        %v1304 = vpop.f32.mrf.mxu0
        %v1305 = vadd.f32 %v1189, %v1304
        %v1306 = vpop.f32.mrf.mxu0
        %v1307 = vadd.f32 %v1191, %v1306
        %1308 = vmatmul.bf16.gmra.mxu0 %v1272
        %v1309 = vpop.f32.mrf.mxu0
        %v1310 = vadd.f32 %v1194, %v1309
        %v1311 = vpop.f32.mrf.mxu0
        %v1312 = vadd.f32 %v1196, %v1311
        %1313 = vmatmul.bf16.gmra.mxu0 %v1275
        %v1314 = vpop.f32.mrf.mxu0
        %v1315 = vadd.f32 %v1199, %v1314
        %v1316 = vpop.f32.mrf.mxu0
        %v1317 = vadd.f32 %v1201, %v1316
        %1318 = vmatmul.bf16.gmra.mxu0 %v1278
        %v1319 = vpop.f32.mrf.mxu0
        %v1320 = vadd.f32 %v1204, %v1319
        %v1321 = vpop.f32.mrf.mxu0
        %v1322 = vadd.f32 %v1206, %v1321
        %1323 = vmatmul.bf16.gmra.mxu0 %v1281
        %v1324 = vpop.f32.mrf.mxu0
        %v1325 = vadd.f32 %v1209, %v1324
        %v1326 = vpop.f32.mrf.mxu0
        %v1327 = vadd.f32 %v1211, %v1326
        %1328 = vmatmul.bf16.gmra.mxu0 %v1284
        %v1329 = vpop.f32.mrf.mxu0
        %v1330 = vadd.f32 %v1214, %v1329
        %v1331 = vpop.f32.mrf.mxu0
        %v1332 = vadd.f32 %v1216, %v1331
        %1333 = vmatmul.bf16.gmra.mxu0 %v1287
        %v1334 = vpop.f32.mrf.mxu0
        %v1335 = vadd.f32 %v1219, %v1334
        %v1336 = vpop.f32.mrf.mxu0
        %v1337 = vadd.f32 %v1221, %v1336
        %1338 = vmatmul.bf16.gmra.mxu0 %v1290
        %v1339 = vpop.f32.mrf.mxu0
        %v1340 = vadd.f32 %v1224, %v1339
        %v1341 = vpop.f32.mrf.mxu0
        %v1342 = vadd.f32 %v1226, %v1341
        %1343 = vdwg.mxu0
        %v1344 = vld [vmem:[#allocation2] sm:$0xe]
        %v1345 = vld [vmem:[#allocation2 + $0xc] sm:$0xe]
        %v1346 = vld [vmem:[#allocation2 + $0x18] sm:$0xe]
        %v1347 = vld [vmem:[#allocation2 + $0x24] sm:$0xe]
        %v1348 = vld [vmem:[#allocation2 + $0x30] sm:$0xe]
        %v1349 = vld [vmem:[#allocation2 + $0x3c] sm:$0xe]
        %v1350 = vld [vmem:[#allocation2 + $0x48] sm:$0xe]
        %v1351 = vld [vmem:[#allocation2 + $0x54] sm:$0xe]
        %s1352 = scalar_lea.vmem %s3, 8
        %v1353 = vld [vmem:[%s1352] sm:$0xf]
        %vm1370 = vcmask 1042432
        %vm1371 = vcmask 1046532
        %vm1372 = vmor %vm1370, %vm1371
        %v1373 = vrot.slane %v1344, 5
        %v1374 = vrot.slane %v1373, 4
        %v1375 = vrot.slane %v907, 5
        %v1376 = vsel %vm1372, %v1374, %v1375
        %v1377 = vrot.slane %v1375, 4
        %v1378 = vrot.slane %v923, 5
        %v1379 = vsel %vm1372, %v1377, %v1378
        %v1380 = vrot.slane %v1345, 5
        %v1381 = vrot.slane %v1380, 4
        %v1382 = vrot.slane %v909, 5
        %v1383 = vsel %vm1372, %v1381, %v1382
        %v1384 = vrot.slane %v1382, 4
        %v1385 = vrot.slane %v924, 5
        %v1386 = vsel %vm1372, %v1384, %v1385
        %v1387 = vrot.slane %v1346, 5
        %v1388 = vrot.slane %v1387, 4
        %v1389 = vrot.slane %v911, 5
        %v1390 = vsel %vm1372, %v1388, %v1389
        %v1391 = vrot.slane %v1389, 4
        %v1392 = vrot.slane %v925, 5
        %v1393 = vsel %vm1372, %v1391, %v1392
        %v1394 = vrot.slane %v1347, 5
        %v1395 = vrot.slane %v1394, 4
        %v1396 = vrot.slane %v913, 5
        %v1397 = vsel %vm1372, %v1395, %v1396
        %v1398 = vrot.slane %v1396, 4
        %v1399 = vrot.slane %v926, 5
        %v1400 = vsel %vm1372, %v1398, %v1399
        %v1401 = vrot.slane %v1348, 5
        %v1402 = vrot.slane %v1401, 4
        %v1403 = vrot.slane %v915, 5
        %v1404 = vsel %vm1372, %v1402, %v1403
        %v1405 = vrot.slane %v1403, 4
        %v1406 = vrot.slane %v927, 5
        %v1407 = vsel %vm1372, %v1405, %v1406
        %v1408 = vrot.slane %v1349, 5
        %v1409 = vrot.slane %v1408, 4
        %v1410 = vrot.slane %v917, 5
        %v1411 = vsel %vm1372, %v1409, %v1410
        %v1412 = vrot.slane %v1410, 4
        %v1413 = vrot.slane %v928, 5
        %v1414 = vsel %vm1372, %v1412, %v1413
        %v1415 = vrot.slane %v1350, 5
        %v1416 = vrot.slane %v1415, 4
        %v1417 = vrot.slane %v919, 5
        %v1418 = vsel %vm1372, %v1416, %v1417
        %v1419 = vrot.slane %v1417, 4
        %v1420 = vrot.slane %v929, 5
        %v1421 = vsel %vm1372, %v1419, %v1420
        %v1422 = vrot.slane %v1351, 5
        %v1423 = vrot.slane %v1422, 4
        %v1424 = vrot.slane %v921, 5
        %v1425 = vsel %vm1372, %v1423, %v1424
        %v1426 = vrot.slane %v1424, 4
        %v1427 = vrot.slane %v930, 5
        %v1428 = vsel %vm1372, %v1426, %v1427
        %v1429 = vunpack.c.l.b16 %v1376
        %v1430 = vunpack.c.l.b16 %v1379
        %v1431 = vunpack.c.l.b16 %v1383
        %v1432 = vunpack.c.l.b16 %v1386
        %v1433 = vunpack.c.l.b16 %v1390
        %v1434 = vunpack.c.l.b16 %v1393
        %v1435 = vunpack.c.l.b16 %v1397
        %v1436 = vunpack.c.l.b16 %v1400
        %v1437 = vunpack.c.l.b16 %v1404
        %v1438 = vunpack.c.l.b16 %v1407
        %v1439 = vunpack.c.l.b16 %v1411
        %v1440 = vunpack.c.l.b16 %v1414
        %v1441 = vunpack.c.l.b16 %v1418
        %v1442 = vunpack.c.l.b16 %v1421
        %v1443 = vunpack.c.l.b16 %v1425
        %v1444 = vunpack.c.l.b16 %v1428
        %v1445 = vpack.c.b16 %v1430, %v1429
        %v1446 = vpack.c.b16 %v1432, %v1431
        %v1447 = vpack.c.b16 %v1434, %v1433
        %v1448 = vpack.c.b16 %v1436, %v1435
        %v1449 = vpack.c.b16 %v1438, %v1437
        %v1450 = vpack.c.b16 %v1440, %v1439
        %v1451 = vpack.c.b16 %v1442, %v1441
        %v1452 = vpack.c.b16 %v1444, %v1443
        %v1454 = vsel %vm472, %v1445, 0
        %v1457 = vsel %vm472, %v1446, 0
        %v1460 = vsel %vm472, %v1447, 0
        %v1463 = vsel %vm472, %v1448, 0
        %v1466 = vsel %vm472, %v1449, 0
        %v1469 = vsel %vm472, %v1450, 0
        %v1472 = vsel %vm472, %v1451, 0
        %v1475 = vsel %vm472, %v1452, 0
        %v1478 = vsel %vm497, %v1353, 0
        %1480 = vmatpush.bf16.msra.mxu0 0
        %1481 = vmatpush.bf16.msra.mxu0 0
        %1482 = vmatpush.bf16.msra.mxu0 0
        %1483 = vmatpush.bf16.msra.mxu0 0
        %1484 = vmatpush.bf16.msra.mxu0 0
        %1485 = vmatpush.bf16.msra.mxu0 0
        %1486 = vmatpush.bf16.msra.mxu0 0
        %1487 = vmatpush.bf16.msra.mxu0 %v1478
        %1488 = vmatmul.bf16.gmra.mxu0 %v1454
        %v1489 = vpop.f32.mrf.mxu0
        %v1490 = vadd.f32 0.0, %v1489
        %v1491 = vpop.f32.mrf.mxu0
        %v1492 = vadd.f32 0.0, %v1491
        %1493 = vmatmul.bf16.gmra.mxu0 %v1457
        %v1494 = vpop.f32.mrf.mxu0
        %v1495 = vadd.f32 0.0, %v1494
        %v1496 = vpop.f32.mrf.mxu0
        %v1497 = vadd.f32 0.0, %v1496
        %1498 = vmatmul.bf16.gmra.mxu0 %v1460
        %v1499 = vpop.f32.mrf.mxu0
        %v1500 = vadd.f32 0.0, %v1499
        %v1501 = vpop.f32.mrf.mxu0
        %v1502 = vadd.f32 0.0, %v1501
        %1503 = vmatmul.bf16.gmra.mxu0 %v1463
        %v1504 = vpop.f32.mrf.mxu0
        %v1505 = vadd.f32 0.0, %v1504
        %v1506 = vpop.f32.mrf.mxu0
        %v1507 = vadd.f32 0.0, %v1506
        %1508 = vmatmul.bf16.gmra.mxu0 %v1466
        %v1509 = vpop.f32.mrf.mxu0
        %v1510 = vadd.f32 0.0, %v1509
        %v1511 = vpop.f32.mrf.mxu0
        %v1512 = vadd.f32 0.0, %v1511
        %1513 = vmatmul.bf16.gmra.mxu0 %v1469
        %v1514 = vpop.f32.mrf.mxu0
        %v1515 = vadd.f32 0.0, %v1514
        %v1516 = vpop.f32.mrf.mxu0
        %v1517 = vadd.f32 0.0, %v1516
        %1518 = vmatmul.bf16.gmra.mxu0 %v1472
        %v1519 = vpop.f32.mrf.mxu0
        %v1520 = vadd.f32 0.0, %v1519
        %v1521 = vpop.f32.mrf.mxu0
        %v1522 = vadd.f32 0.0, %v1521
        %1523 = vmatmul.bf16.gmra.mxu0 %v1475
        %v1524 = vpop.f32.mrf.mxu0
        %v1525 = vadd.f32 0.0, %v1524
        %v1526 = vpop.f32.mrf.mxu0
        %v1527 = vadd.f32 0.0, %v1526
        %1528 = vdwg.mxu0
        %v1529 = vadd.f32 %v1305, %v1490
        %v1530 = vadd.f32 %v1307, %v1492
        %v1531 = vadd.f32 %v1310, %v1495
        %v1532 = vadd.f32 %v1312, %v1497
        %v1533 = vadd.f32 %v1315, %v1500
        %v1534 = vadd.f32 %v1317, %v1502
        %v1535 = vadd.f32 %v1320, %v1505
        %v1536 = vadd.f32 %v1322, %v1507
        %v1537 = vadd.f32 %v1325, %v1510
        %v1538 = vadd.f32 %v1327, %v1512
        %v1539 = vadd.f32 %v1330, %v1515
        %v1540 = vadd.f32 %v1332, %v1517
        %v1541 = vadd.f32 %v1335, %v1520
        %v1542 = vadd.f32 %v1337, %v1522
        %v1543 = vadd.f32 %v1340, %v1525
        %v1544 = vadd.f32 %v1342, %v1527
        %v1545 = vld [vmem:[%s729] sm:$0xf]
        %v1546 = vld [vmem:[%s729 + $0x4] sm:$0xf]
        %v1547 = vld [vmem:[%s729 + $0xc] sm:$0xf]
        %v1548 = vld [vmem:[%s729 + $0x10] sm:$0xf]
        %v1549 = vld [vmem:[%s729 + $0x18] sm:$0xf]
        %v1550 = vld [vmem:[%s729 + $0x1c] sm:$0xf]
        %v1551 = vld [vmem:[%s729 + $0x24] sm:$0xf]
        %v1552 = vld [vmem:[%s729 + $0x28] sm:$0xf]
        %v1553 = vld [vmem:[%s729 + $0x30] sm:$0xf]
        %v1554 = vld [vmem:[%s729 + $0x34] sm:$0xf]
        %v1555 = vld [vmem:[%s729 + $0x3c] sm:$0xf]
        %v1556 = vld [vmem:[%s729 + $0x40] sm:$0xf]
        %v1557 = vld [vmem:[%s729 + $0x48] sm:$0xf]
        %v1558 = vld [vmem:[%s729 + $0x4c] sm:$0xf]
        %v1559 = vld [vmem:[%s729 + $0x54] sm:$0xf]
        %v1560 = vld [vmem:[%s729 + $0x58] sm:$0xf]
        %s1561 = scalar_lea.vmem %s3, 12
        %v1562 = vld [vmem:[%s1561] sm:$0xf]
        %v1579 = vunpack.c.l.b16 %v1545
        %v1580 = vunpack.c.l.b16 %v1546
        %v1581 = vunpack.c.l.b16 %v1547
        %v1582 = vunpack.c.l.b16 %v1548
        %v1583 = vunpack.c.l.b16 %v1549
        %v1584 = vunpack.c.l.b16 %v1550
        %v1585 = vunpack.c.l.b16 %v1551
        %v1586 = vunpack.c.l.b16 %v1552
        %v1587 = vunpack.c.l.b16 %v1553
        %v1588 = vunpack.c.l.b16 %v1554
        %v1589 = vunpack.c.l.b16 %v1555
        %v1590 = vunpack.c.l.b16 %v1556
        %v1591 = vunpack.c.l.b16 %v1557
        %v1592 = vunpack.c.l.b16 %v1558
        %v1593 = vunpack.c.l.b16 %v1559
        %v1594 = vunpack.c.l.b16 %v1560
        %v1595 = vpack.c.b16 %v1580, %v1579
        %v1596 = vpack.c.b16 %v1582, %v1581
        %v1597 = vpack.c.b16 %v1584, %v1583
        %v1598 = vpack.c.b16 %v1586, %v1585
        %v1599 = vpack.c.b16 %v1588, %v1587
        %v1600 = vpack.c.b16 %v1590, %v1589
        %v1601 = vpack.c.b16 %v1592, %v1591
        %v1602 = vpack.c.b16 %v1594, %v1593
        %v1604 = vsel %vm472, %v1595, 0
        %v1607 = vsel %vm472, %v1596, 0
        %v1610 = vsel %vm472, %v1597, 0
        %v1613 = vsel %vm472, %v1598, 0
        %v1616 = vsel %vm472, %v1599, 0
        %v1619 = vsel %vm472, %v1600, 0
        %v1622 = vsel %vm472, %v1601, 0
        %v1625 = vsel %vm472, %v1602, 0
        %v1628 = vsel %vm497, %v1562, 0
        %1630 = vmatpush.bf16.msra.mxu0 0
        %1631 = vmatpush.bf16.msra.mxu0 0
        %1632 = vmatpush.bf16.msra.mxu0 0
        %1633 = vmatpush.bf16.msra.mxu0 0
        %1634 = vmatpush.bf16.msra.mxu0 0
        %1635 = vmatpush.bf16.msra.mxu0 0
        %1636 = vmatpush.bf16.msra.mxu0 0
        %1637 = vmatpush.bf16.msra.mxu0 %v1628
        %1638 = vmatmul.bf16.gmra.mxu0 %v1604
        %v1639 = vpop.f32.mrf.mxu0
        %v1640 = vadd.f32 0.0, %v1639
        %v1641 = vpop.f32.mrf.mxu0
        %v1642 = vadd.f32 0.0, %v1641
        %1643 = vmatmul.bf16.gmra.mxu0 %v1607
        %v1644 = vpop.f32.mrf.mxu0
        %v1645 = vadd.f32 0.0, %v1644
        %v1646 = vpop.f32.mrf.mxu0
        %v1647 = vadd.f32 0.0, %v1646
        %1648 = vmatmul.bf16.gmra.mxu0 %v1610
        %v1649 = vpop.f32.mrf.mxu0
        %v1650 = vadd.f32 0.0, %v1649
        %v1651 = vpop.f32.mrf.mxu0
        %v1652 = vadd.f32 0.0, %v1651
        %1653 = vmatmul.bf16.gmra.mxu0 %v1613
        %v1654 = vpop.f32.mrf.mxu0
        %v1655 = vadd.f32 0.0, %v1654
        %v1656 = vpop.f32.mrf.mxu0
        %v1657 = vadd.f32 0.0, %v1656
        %1658 = vmatmul.bf16.gmra.mxu0 %v1616
        %v1659 = vpop.f32.mrf.mxu0
        %v1660 = vadd.f32 0.0, %v1659
        %v1661 = vpop.f32.mrf.mxu0
        %v1662 = vadd.f32 0.0, %v1661
        %1663 = vmatmul.bf16.gmra.mxu0 %v1619
        %v1664 = vpop.f32.mrf.mxu0
        %v1665 = vadd.f32 0.0, %v1664
        %v1666 = vpop.f32.mrf.mxu0
        %v1667 = vadd.f32 0.0, %v1666
        %1668 = vmatmul.bf16.gmra.mxu0 %v1622
        %v1669 = vpop.f32.mrf.mxu0
        %v1670 = vadd.f32 0.0, %v1669
        %v1671 = vpop.f32.mrf.mxu0
        %v1672 = vadd.f32 0.0, %v1671
        %1673 = vmatmul.bf16.gmra.mxu0 %v1625
        %v1674 = vpop.f32.mrf.mxu0
        %v1675 = vadd.f32 0.0, %v1674
        %v1676 = vpop.f32.mrf.mxu0
        %v1677 = vadd.f32 0.0, %v1676
        %1678 = vdwg.mxu0
        %v1679 = vadd.f32 %v1529, %v1640
        %v1680 = vadd.f32 %v1530, %v1642
        %v1681 = vadd.f32 %v1531, %v1645
        %v1682 = vadd.f32 %v1532, %v1647
        %v1683 = vadd.f32 %v1533, %v1650
        %v1684 = vadd.f32 %v1534, %v1652
        %v1685 = vadd.f32 %v1535, %v1655
        %v1686 = vadd.f32 %v1536, %v1657
        %v1687 = vadd.f32 %v1537, %v1660
        %v1688 = vadd.f32 %v1538, %v1662
        %v1689 = vadd.f32 %v1539, %v1665
        %v1690 = vadd.f32 %v1540, %v1667
        %v1691 = vadd.f32 %v1541, %v1670
        %v1692 = vadd.f32 %v1542, %v1672
        %v1693 = vadd.f32 %v1543, %v1675
        %v1694 = vadd.f32 %v1544, %v1677
        %v1695 = vld [vmem:[%s729] sm:$0xf]
        %v1696 = vld [vmem:[%s729 + $0x4] sm:$0xf]
        %v1697 = vld [vmem:[%s729 + $0x8] sm:$0x1]
        %v1698 = vld [vmem:[%s729 + $0xc] sm:$0xf]
        %v1699 = vld [vmem:[%s729 + $0x10] sm:$0xf]
        %v1700 = vld [vmem:[%s729 + $0x14] sm:$0x1]
        %v1701 = vld [vmem:[%s729 + $0x18] sm:$0xf]
        %v1702 = vld [vmem:[%s729 + $0x1c] sm:$0xf]
        %v1703 = vld [vmem:[%s729 + $0x20] sm:$0x1]
        %v1704 = vld [vmem:[%s729 + $0x24] sm:$0xf]
        %v1705 = vld [vmem:[%s729 + $0x28] sm:$0xf]
        %v1706 = vld [vmem:[%s729 + $0x2c] sm:$0x1]
        %v1707 = vld [vmem:[%s729 + $0x30] sm:$0xf]
        %v1708 = vld [vmem:[%s729 + $0x34] sm:$0xf]
        %v1709 = vld [vmem:[%s729 + $0x38] sm:$0x1]
        %v1710 = vld [vmem:[%s729 + $0x3c] sm:$0xf]
        %v1711 = vld [vmem:[%s729 + $0x40] sm:$0xf]
        %v1712 = vld [vmem:[%s729 + $0x44] sm:$0x1]
        %v1713 = vld [vmem:[%s729 + $0x48] sm:$0xf]
        %v1714 = vld [vmem:[%s729 + $0x4c] sm:$0xf]
        %v1715 = vld [vmem:[%s729 + $0x50] sm:$0x1]
        %v1716 = vld [vmem:[%s729 + $0x54] sm:$0xf]
        %v1717 = vld [vmem:[%s729 + $0x58] sm:$0xf]
        %v1718 = vld [vmem:[%s729 + $0x5c] sm:$0x1]
        %s1719 = scalar_lea.vmem %s3, 16
        %v1720 = vld [vmem:[%s1719] sm:$0xf]
        %v1722 = vshrl.u32 %v1695, 16
        %v1724 = vrot.slane %v1722, 4
        %v1725 = vshll.u32 %v1695, 16
        %v1727 = vrot.slane %v1725, 5
        %v1728 = vor.u32 %v1724, %v1727
        %v1729 = vrot.slane %v1728, 4
        %v1731 = vshll.u32 %v1696, 16
        %v1733 = vrot.slane %v1731, 5
        %v1734 = vsel %vm935, %v1729, %v1733
        %v1735 = vshrl.u32 %v1696, 16
        %v1737 = vrot.slane %v1735, 4
        %v1738 = vor.u32 %v1737, %v1733
        %v1739 = vrot.slane %v1738, 4
        %v1741 = vshll.u32 %v1697, 16
        %v1743 = vrot.slane %v1741, 5
        %v1744 = vsel %vm935, %v1739, %v1743
        %v1746 = vshrl.u32 %v1698, 16
        %v1748 = vrot.slane %v1746, 4
        %v1749 = vshll.u32 %v1698, 16
        %v1751 = vrot.slane %v1749, 5
        %v1752 = vor.u32 %v1748, %v1751
        %v1753 = vrot.slane %v1752, 4
        %v1755 = vshll.u32 %v1699, 16
        %v1757 = vrot.slane %v1755, 5
        %v1758 = vsel %vm935, %v1753, %v1757
        %v1759 = vshrl.u32 %v1699, 16
        %v1761 = vrot.slane %v1759, 4
        %v1762 = vor.u32 %v1761, %v1757
        %v1763 = vrot.slane %v1762, 4
        %v1765 = vshll.u32 %v1700, 16
        %v1767 = vrot.slane %v1765, 5
        %v1768 = vsel %vm935, %v1763, %v1767
        %v1770 = vshrl.u32 %v1701, 16
        %v1772 = vrot.slane %v1770, 4
        %v1773 = vshll.u32 %v1701, 16
        %v1775 = vrot.slane %v1773, 5
        %v1776 = vor.u32 %v1772, %v1775
        %v1777 = vrot.slane %v1776, 4
        %v1779 = vshll.u32 %v1702, 16
        %v1781 = vrot.slane %v1779, 5
        %v1782 = vsel %vm935, %v1777, %v1781
        %v1783 = vshrl.u32 %v1702, 16
        %v1785 = vrot.slane %v1783, 4
        %v1786 = vor.u32 %v1785, %v1781
        %v1787 = vrot.slane %v1786, 4
        %v1789 = vshll.u32 %v1703, 16
        %v1791 = vrot.slane %v1789, 5
        %v1792 = vsel %vm935, %v1787, %v1791
        %v1794 = vshrl.u32 %v1704, 16
        %v1796 = vrot.slane %v1794, 4
        %v1797 = vshll.u32 %v1704, 16
        %v1799 = vrot.slane %v1797, 5
        %v1800 = vor.u32 %v1796, %v1799
        %v1801 = vrot.slane %v1800, 4
        %v1803 = vshll.u32 %v1705, 16
        %v1805 = vrot.slane %v1803, 5
        %v1806 = vsel %vm935, %v1801, %v1805
        %v1807 = vshrl.u32 %v1705, 16
        %v1809 = vrot.slane %v1807, 4
        %v1810 = vor.u32 %v1809, %v1805
        %v1811 = vrot.slane %v1810, 4
        %v1813 = vshll.u32 %v1706, 16
        %v1815 = vrot.slane %v1813, 5
        %v1816 = vsel %vm935, %v1811, %v1815
        %v1818 = vshrl.u32 %v1707, 16
        %v1820 = vrot.slane %v1818, 4
        %v1821 = vshll.u32 %v1707, 16
        %v1823 = vrot.slane %v1821, 5
        %v1824 = vor.u32 %v1820, %v1823
        %v1825 = vrot.slane %v1824, 4
        %v1827 = vshll.u32 %v1708, 16
        %v1829 = vrot.slane %v1827, 5
        %v1830 = vsel %vm935, %v1825, %v1829
        %v1831 = vshrl.u32 %v1708, 16
        %v1833 = vrot.slane %v1831, 4
        %v1834 = vor.u32 %v1833, %v1829
        %v1835 = vrot.slane %v1834, 4
        %v1837 = vshll.u32 %v1709, 16
        %v1839 = vrot.slane %v1837, 5
        %v1840 = vsel %vm935, %v1835, %v1839
        %v1842 = vshrl.u32 %v1710, 16
        %v1844 = vrot.slane %v1842, 4
        %v1845 = vshll.u32 %v1710, 16
        %v1847 = vrot.slane %v1845, 5
        %v1848 = vor.u32 %v1844, %v1847
        %v1849 = vrot.slane %v1848, 4
        %v1851 = vshll.u32 %v1711, 16
        %v1853 = vrot.slane %v1851, 5
        %v1854 = vsel %vm935, %v1849, %v1853
        %v1855 = vshrl.u32 %v1711, 16
        %v1857 = vrot.slane %v1855, 4
        %v1858 = vor.u32 %v1857, %v1853
        %v1859 = vrot.slane %v1858, 4
        %v1861 = vshll.u32 %v1712, 16
        %v1863 = vrot.slane %v1861, 5
        %v1864 = vsel %vm935, %v1859, %v1863
        %v1866 = vshrl.u32 %v1713, 16
        %v1868 = vrot.slane %v1866, 4
        %v1869 = vshll.u32 %v1713, 16
        %v1871 = vrot.slane %v1869, 5
        %v1872 = vor.u32 %v1868, %v1871
        %v1873 = vrot.slane %v1872, 4
        %v1875 = vshll.u32 %v1714, 16
        %v1877 = vrot.slane %v1875, 5
        %v1878 = vsel %vm935, %v1873, %v1877
        %v1879 = vshrl.u32 %v1714, 16
        %v1881 = vrot.slane %v1879, 4
        %v1882 = vor.u32 %v1881, %v1877
        %v1883 = vrot.slane %v1882, 4
        %v1885 = vshll.u32 %v1715, 16
        %v1887 = vrot.slane %v1885, 5
        %v1888 = vsel %vm935, %v1883, %v1887
        %v1890 = vshrl.u32 %v1716, 16
        %v1892 = vrot.slane %v1890, 4
        %v1893 = vshll.u32 %v1716, 16
        %v1895 = vrot.slane %v1893, 5
        %v1896 = vor.u32 %v1892, %v1895
        %v1897 = vrot.slane %v1896, 4
        %v1899 = vshll.u32 %v1717, 16
        %v1901 = vrot.slane %v1899, 5
        %v1902 = vsel %vm935, %v1897, %v1901
        %v1903 = vshrl.u32 %v1717, 16
        %v1905 = vrot.slane %v1903, 4
        %v1906 = vor.u32 %v1905, %v1901
        %v1907 = vrot.slane %v1906, 4
        %v1909 = vshll.u32 %v1718, 16
        %v1911 = vrot.slane %v1909, 5
        %v1912 = vsel %vm935, %v1907, %v1911
        %v1913 = vunpack.c.l.b16 %v1734
        %v1914 = vunpack.c.l.b16 %v1744
        %v1915 = vunpack.c.l.b16 %v1758
        %v1916 = vunpack.c.l.b16 %v1768
        %v1917 = vunpack.c.l.b16 %v1782
        %v1918 = vunpack.c.l.b16 %v1792
        %v1919 = vunpack.c.l.b16 %v1806
        %v1920 = vunpack.c.l.b16 %v1816
        %v1921 = vunpack.c.l.b16 %v1830
        %v1922 = vunpack.c.l.b16 %v1840
        %v1923 = vunpack.c.l.b16 %v1854
        %v1924 = vunpack.c.l.b16 %v1864
        %v1925 = vunpack.c.l.b16 %v1878
        %v1926 = vunpack.c.l.b16 %v1888
        %v1927 = vunpack.c.l.b16 %v1902
        %v1928 = vunpack.c.l.b16 %v1912
        %v1929 = vpack.c.b16 %v1914, %v1913
        %v1930 = vpack.c.b16 %v1916, %v1915
        %v1931 = vpack.c.b16 %v1918, %v1917
        %v1932 = vpack.c.b16 %v1920, %v1919
        %v1933 = vpack.c.b16 %v1922, %v1921
        %v1934 = vpack.c.b16 %v1924, %v1923
        %v1935 = vpack.c.b16 %v1926, %v1925
        %v1936 = vpack.c.b16 %v1928, %v1927
        %v1938 = vsel %vm472, %v1929, 0
        %v1941 = vsel %vm472, %v1930, 0
        %v1944 = vsel %vm472, %v1931, 0
        %v1947 = vsel %vm472, %v1932, 0
        %v1950 = vsel %vm472, %v1933, 0
        %v1953 = vsel %vm472, %v1934, 0
        %v1956 = vsel %vm472, %v1935, 0
        %v1959 = vsel %vm472, %v1936, 0
        %v1962 = vsel %vm497, %v1720, 0
        %1964 = vmatpush.bf16.msra.mxu0 0
        %1965 = vmatpush.bf16.msra.mxu0 0
        %1966 = vmatpush.bf16.msra.mxu0 0
        %1967 = vmatpush.bf16.msra.mxu0 0
        %1968 = vmatpush.bf16.msra.mxu0 0
        %1969 = vmatpush.bf16.msra.mxu0 0
        %1970 = vmatpush.bf16.msra.mxu0 0
        %1971 = vmatpush.bf16.msra.mxu0 %v1962
        %1972 = vmatmul.bf16.gmra.mxu0 %v1938
        %v1973 = vpop.f32.mrf.mxu0
        %v1974 = vadd.f32 0.0, %v1973
        %v1975 = vpop.f32.mrf.mxu0
        %v1976 = vadd.f32 0.0, %v1975
        %1977 = vmatmul.bf16.gmra.mxu0 %v1941
        %v1978 = vpop.f32.mrf.mxu0
        %v1979 = vadd.f32 0.0, %v1978
        %v1980 = vpop.f32.mrf.mxu0
        %v1981 = vadd.f32 0.0, %v1980
        %1982 = vmatmul.bf16.gmra.mxu0 %v1944
        %v1983 = vpop.f32.mrf.mxu0
        %v1984 = vadd.f32 0.0, %v1983
        %v1985 = vpop.f32.mrf.mxu0
        %v1986 = vadd.f32 0.0, %v1985
        %1987 = vmatmul.bf16.gmra.mxu0 %v1947
        %v1988 = vpop.f32.mrf.mxu0
        %v1989 = vadd.f32 0.0, %v1988
        %v1990 = vpop.f32.mrf.mxu0
        %v1991 = vadd.f32 0.0, %v1990
        %1992 = vmatmul.bf16.gmra.mxu0 %v1950
        %v1993 = vpop.f32.mrf.mxu0
        %v1994 = vadd.f32 0.0, %v1993
        %v1995 = vpop.f32.mrf.mxu0
        %v1996 = vadd.f32 0.0, %v1995
        %1997 = vmatmul.bf16.gmra.mxu0 %v1953
        %v1998 = vpop.f32.mrf.mxu0
        %v1999 = vadd.f32 0.0, %v1998
        %v2000 = vpop.f32.mrf.mxu0
        %v2001 = vadd.f32 0.0, %v2000
        %2002 = vmatmul.bf16.gmra.mxu0 %v1956
        %v2003 = vpop.f32.mrf.mxu0
        %v2004 = vadd.f32 0.0, %v2003
        %v2005 = vpop.f32.mrf.mxu0
        %v2006 = vadd.f32 0.0, %v2005
        %2007 = vmatmul.bf16.gmra.mxu0 %v1959
        %v2008 = vpop.f32.mrf.mxu0
        %v2009 = vadd.f32 0.0, %v2008
        %v2010 = vpop.f32.mrf.mxu0
        %v2011 = vadd.f32 0.0, %v2010
        %2012 = vdwg.mxu0
        %v2013 = vadd.f32 %v1679, %v1974
        %v2014 = vadd.f32 %v1680, %v1976
        %v2015 = vadd.f32 %v1681, %v1979
        %v2016 = vadd.f32 %v1682, %v1981
        %v2017 = vadd.f32 %v1683, %v1984
        %v2018 = vadd.f32 %v1684, %v1986
        %v2019 = vadd.f32 %v1685, %v1989
        %v2020 = vadd.f32 %v1686, %v1991
        %v2021 = vadd.f32 %v1687, %v1994
        %v2022 = vadd.f32 %v1688, %v1996
        %v2023 = vadd.f32 %v1689, %v1999
        %v2024 = vadd.f32 %v1690, %v2001
        %v2025 = vadd.f32 %v1691, %v2004
        %v2026 = vadd.f32 %v1692, %v2006
        %v2027 = vadd.f32 %v1693, %v2009
        %v2028 = vadd.f32 %v1694, %v2011
        %v2029 = vld [vmem:[%s729] sm:$0xe]
        %v2030 = vld [vmem:[%s729 + $0xc] sm:$0xe]
        %v2031 = vld [vmem:[%s729 + $0x18] sm:$0xe]
        %v2032 = vld [vmem:[%s729 + $0x24] sm:$0xe]
        %v2033 = vld [vmem:[%s729 + $0x30] sm:$0xe]
        %v2034 = vld [vmem:[%s729 + $0x3c] sm:$0xe]
        %v2035 = vld [vmem:[%s729 + $0x48] sm:$0xe]
        %v2036 = vld [vmem:[%s729 + $0x54] sm:$0xe]
        %s2037 = scalar_lea.vmem %s3, 20
        %v2038 = vld [vmem:[%s2037] sm:$0xf]
        %v2063 = vrot.slane %v2029, 5
        %v2064 = vrot.slane %v2063, 4
        %v2065 = vrot.slane %v1696, 5
        %v2066 = vsel %vm1372, %v2064, %v2065
        %v2067 = vrot.slane %v2065, 4
        %v2068 = vrot.slane %v1697, 5
        %v2069 = vsel %vm1372, %v2067, %v2068
        %v2070 = vrot.slane %v2030, 5
        %v2071 = vrot.slane %v2070, 4
        %v2072 = vrot.slane %v1699, 5
        %v2073 = vsel %vm1372, %v2071, %v2072
        %v2074 = vrot.slane %v2072, 4
        %v2075 = vrot.slane %v1700, 5
        %v2076 = vsel %vm1372, %v2074, %v2075
        %v2077 = vrot.slane %v2031, 5
        %v2078 = vrot.slane %v2077, 4
        %v2079 = vrot.slane %v1702, 5
        %v2080 = vsel %vm1372, %v2078, %v2079
        %v2081 = vrot.slane %v2079, 4
        %v2082 = vrot.slane %v1703, 5
        %v2083 = vsel %vm1372, %v2081, %v2082
        %v2084 = vrot.slane %v2032, 5
        %v2085 = vrot.slane %v2084, 4
        %v2086 = vrot.slane %v1705, 5
        %v2087 = vsel %vm1372, %v2085, %v2086
        %v2088 = vrot.slane %v2086, 4
        %v2089 = vrot.slane %v1706, 5
        %v2090 = vsel %vm1372, %v2088, %v2089
        %v2091 = vrot.slane %v2033, 5
        %v2092 = vrot.slane %v2091, 4
        %v2093 = vrot.slane %v1708, 5
        %v2094 = vsel %vm1372, %v2092, %v2093
        %v2095 = vrot.slane %v2093, 4
        %v2096 = vrot.slane %v1709, 5
        %v2097 = vsel %vm1372, %v2095, %v2096
        %v2098 = vrot.slane %v2034, 5
        %v2099 = vrot.slane %v2098, 4
        %v2100 = vrot.slane %v1711, 5
        %v2101 = vsel %vm1372, %v2099, %v2100
        %v2102 = vrot.slane %v2100, 4
        %v2103 = vrot.slane %v1712, 5
        %v2104 = vsel %vm1372, %v2102, %v2103
        %v2105 = vrot.slane %v2035, 5
        %v2106 = vrot.slane %v2105, 4
        %v2107 = vrot.slane %v1714, 5
        %v2108 = vsel %vm1372, %v2106, %v2107
        %v2109 = vrot.slane %v2107, 4
        %v2110 = vrot.slane %v1715, 5
        %v2111 = vsel %vm1372, %v2109, %v2110
        %v2112 = vrot.slane %v2036, 5
        %v2113 = vrot.slane %v2112, 4
        %v2114 = vrot.slane %v1717, 5
        %v2115 = vsel %vm1372, %v2113, %v2114
        %v2116 = vrot.slane %v2114, 4
        %v2117 = vrot.slane %v1718, 5
        %v2118 = vsel %vm1372, %v2116, %v2117
        %v2119 = vunpack.c.l.b16 %v2066
        %v2120 = vunpack.c.l.b16 %v2069
        %v2121 = vunpack.c.l.b16 %v2073
        %v2122 = vunpack.c.l.b16 %v2076
        %v2123 = vunpack.c.l.b16 %v2080
        %v2124 = vunpack.c.l.b16 %v2083
        %v2125 = vunpack.c.l.b16 %v2087
        %v2126 = vunpack.c.l.b16 %v2090
        %v2127 = vunpack.c.l.b16 %v2094
        %v2128 = vunpack.c.l.b16 %v2097
        %v2129 = vunpack.c.l.b16 %v2101
        %v2130 = vunpack.c.l.b16 %v2104
        %v2131 = vunpack.c.l.b16 %v2108
        %v2132 = vunpack.c.l.b16 %v2111
        %v2133 = vunpack.c.l.b16 %v2115
        %v2134 = vunpack.c.l.b16 %v2118
        %v2135 = vpack.c.b16 %v2120, %v2119
        %v2136 = vpack.c.b16 %v2122, %v2121
        %v2137 = vpack.c.b16 %v2124, %v2123
        %v2138 = vpack.c.b16 %v2126, %v2125
        %v2139 = vpack.c.b16 %v2128, %v2127
        %v2140 = vpack.c.b16 %v2130, %v2129
        %v2141 = vpack.c.b16 %v2132, %v2131
        %v2142 = vpack.c.b16 %v2134, %v2133
        %v2144 = vsel %vm472, %v2135, 0
        %v2147 = vsel %vm472, %v2136, 0
        %v2150 = vsel %vm472, %v2137, 0
        %v2153 = vsel %vm472, %v2138, 0
        %v2156 = vsel %vm472, %v2139, 0
        %v2159 = vsel %vm472, %v2140, 0
        %v2162 = vsel %vm472, %v2141, 0
        %v2165 = vsel %vm472, %v2142, 0
        %v2168 = vsel %vm497, %v2038, 0
        %2170 = vmatpush.bf16.msra.mxu0 0
        %2171 = vmatpush.bf16.msra.mxu0 0
        %2172 = vmatpush.bf16.msra.mxu0 0
        %2173 = vmatpush.bf16.msra.mxu0 0
        %2174 = vmatpush.bf16.msra.mxu0 0
        %2175 = vmatpush.bf16.msra.mxu0 0
        %2176 = vmatpush.bf16.msra.mxu0 0
        %2177 = vmatpush.bf16.msra.mxu0 %v2168
        %2178 = vmatmul.bf16.gmra.mxu0 %v2144
        %v2179 = vpop.f32.mrf.mxu0
        %v2180 = vadd.f32 0.0, %v2179
        %v2181 = vpop.f32.mrf.mxu0
        %v2182 = vadd.f32 0.0, %v2181
        %2183 = vmatmul.bf16.gmra.mxu0 %v2147
        %v2184 = vpop.f32.mrf.mxu0
        %v2185 = vadd.f32 0.0, %v2184
        %v2186 = vpop.f32.mrf.mxu0
        %v2187 = vadd.f32 0.0, %v2186
        %2188 = vmatmul.bf16.gmra.mxu0 %v2150
        %v2189 = vpop.f32.mrf.mxu0
        %v2190 = vadd.f32 0.0, %v2189
        %v2191 = vpop.f32.mrf.mxu0
        %v2192 = vadd.f32 0.0, %v2191
        %2193 = vmatmul.bf16.gmra.mxu0 %v2153
        %v2194 = vpop.f32.mrf.mxu0
        %v2195 = vadd.f32 0.0, %v2194
        %v2196 = vpop.f32.mrf.mxu0
        %v2197 = vadd.f32 0.0, %v2196
        %2198 = vmatmul.bf16.gmra.mxu0 %v2156
        %v2199 = vpop.f32.mrf.mxu0
        %v2200 = vadd.f32 0.0, %v2199
        %v2201 = vpop.f32.mrf.mxu0
        %v2202 = vadd.f32 0.0, %v2201
        %2203 = vmatmul.bf16.gmra.mxu0 %v2159
        %v2204 = vpop.f32.mrf.mxu0
        %v2205 = vadd.f32 0.0, %v2204
        %v2206 = vpop.f32.mrf.mxu0
        %v2207 = vadd.f32 0.0, %v2206
        %2208 = vmatmul.bf16.gmra.mxu0 %v2162
        %v2209 = vpop.f32.mrf.mxu0
        %v2210 = vadd.f32 0.0, %v2209
        %v2211 = vpop.f32.mrf.mxu0
        %v2212 = vadd.f32 0.0, %v2211
        %2213 = vmatmul.bf16.gmra.mxu0 %v2165
        %v2214 = vpop.f32.mrf.mxu0
        %v2215 = vadd.f32 0.0, %v2214
        %v2216 = vpop.f32.mrf.mxu0
        %v2217 = vadd.f32 0.0, %v2216
        %2218 = vdwg.mxu0
        %v2219 = vadd.f32 %v2013, %v2180
        %v2220 = vadd.f32 %v2014, %v2182
        %v2221 = vadd.f32 %v2015, %v2185
        %v2222 = vadd.f32 %v2016, %v2187
        %v2223 = vadd.f32 %v2017, %v2190
        %v2224 = vadd.f32 %v2018, %v2192
        %v2225 = vadd.f32 %v2019, %v2195
        %v2226 = vadd.f32 %v2020, %v2197
        %v2227 = vadd.f32 %v2021, %v2200
        %v2228 = vadd.f32 %v2022, %v2202
        %v2229 = vadd.f32 %v2023, %v2205
        %v2230 = vadd.f32 %v2024, %v2207
        %v2231 = vadd.f32 %v2025, %v2210
        %v2232 = vadd.f32 %v2026, %v2212
        %v2233 = vadd.f32 %v2027, %v2215
        %v2234 = vadd.f32 %v2028, %v2217
        %v2235 = vld [vmem:[%s4] sm:$0x1]
        %v2237 = vperm.slane %v2235, 0
        %v2239 = vadd.f32 %v2219, %v2237
        %v2240 = vadd.f32 %v2220, %v2237
        %v2241 = vadd.f32 %v2221, %v2237
        %v2242 = vadd.f32 %v2222, %v2237
        %v2243 = vadd.f32 %v2223, %v2237
        %v2244 = vadd.f32 %v2224, %v2237
        %v2245 = vadd.f32 %v2225, %v2237
        %v2246 = vadd.f32 %v2226, %v2237
        %v2247 = vadd.f32 %v2227, %v2237
        %v2248 = vadd.f32 %v2228, %v2237
        %v2249 = vadd.f32 %v2229, %v2237
        %v2250 = vadd.f32 %v2230, %v2237
        %v2251 = vadd.f32 %v2231, %v2237
        %v2252 = vadd.f32 %v2232, %v2237
        %v2253 = vadd.f32 %v2233, %v2237
        %v2254 = vadd.f32 %v2234, %v2237
        %v2255 = vld [vmem:[%s387] sm:$0xff]
        %v2256 = vld [vmem:[%s387 + $0x8] sm:$0xff]
        %v2257 = vld [vmem:[%s387 + $0x10] sm:$0xff]
        %v2258 = vld [vmem:[%s387 + $0x18] sm:$0xff]
        %v2259 = vld [vmem:[%s387 + $0x20] sm:$0xff]
        %v2260 = vld [vmem:[%s387 + $0x28] sm:$0xff]
        %v2261 = vld [vmem:[%s387 + $0x30] sm:$0xff]
        %v2262 = vld [vmem:[%s387 + $0x38] sm:$0xff]
        %v2263 = vld [vmem:[%s387 + $0x40] sm:$0xff]
        %v2264 = vld [vmem:[%s387 + $0x48] sm:$0xff]
        %v2265 = vld [vmem:[%s387 + $0x50] sm:$0xff]
        %v2266 = vld [vmem:[%s387 + $0x58] sm:$0xff]
        %v2267 = vld [vmem:[%s387 + $0x60] sm:$0xff]
        %v2268 = vld [vmem:[%s387 + $0x68] sm:$0xff]
        %v2269 = vld [vmem:[%s387 + $0x70] sm:$0xff]
        %v2270 = vld [vmem:[%s387 + $0x78] sm:$0xff]
        %v2271 = vadd.f32 %v2239, %v2255
        %v2272 = vadd.f32 %v2240, %v2256
        %v2273 = vadd.f32 %v2241, %v2257
        %v2274 = vadd.f32 %v2242, %v2258
        %v2275 = vadd.f32 %v2243, %v2259
        %v2276 = vadd.f32 %v2244, %v2260
        %v2277 = vadd.f32 %v2245, %v2261
        %v2278 = vadd.f32 %v2246, %v2262
        %v2279 = vadd.f32 %v2247, %v2263
        %v2280 = vadd.f32 %v2248, %v2264
        %v2281 = vadd.f32 %v2249, %v2265
        %v2282 = vadd.f32 %v2250, %v2266
        %v2283 = vadd.f32 %v2251, %v2267
        %v2284 = vadd.f32 %v2252, %v2268
        %v2285 = vadd.f32 %v2253, %v2269
        %v2286 = vadd.f32 %v2254, %v2270
        %v2287 = vmul.f32 %v2271, 0.70710677
        %v2288 = vmul.f32 %v2272, 0.70710677
        %v2289 = vmul.f32 %v2273, 0.70710677
        %v2290 = vmul.f32 %v2274, 0.70710677
        %v2291 = vmul.f32 %v2275, 0.70710677
        %v2292 = vmul.f32 %v2276, 0.70710677
        %v2293 = vmul.f32 %v2277, 0.70710677
        %v2294 = vmul.f32 %v2278, 0.70710677
        %v2295 = vmul.f32 %v2279, 0.70710677
        %v2296 = vmul.f32 %v2280, 0.70710677
        %v2297 = vmul.f32 %v2281, 0.70710677
        %v2298 = vmul.f32 %v2282, 0.70710677
        %v2299 = vmul.f32 %v2283, 0.70710677
        %v2300 = vmul.f32 %v2284, 0.70710677
        %v2301 = vmul.f32 %v2285, 0.70710677
        %v2302 = vmul.f32 %v2286, 0.70710677
        %v2303 = vpack.c.bf16 %v2287, %v2287
        %v2304 = vpack.c.bf16 %v2288, %v2288
        %v2305 = vpack.c.bf16 %v2289, %v2289
        %v2306 = vpack.c.bf16 %v2290, %v2290
        %v2307 = vpack.c.bf16 %v2291, %v2291
        %v2308 = vpack.c.bf16 %v2292, %v2292
        %v2309 = vpack.c.bf16 %v2293, %v2293
        %v2310 = vpack.c.bf16 %v2294, %v2294
        %v2311 = vpack.c.bf16 %v2295, %v2295
        %v2312 = vpack.c.bf16 %v2296, %v2296
        %v2313 = vpack.c.bf16 %v2297, %v2297
        %v2314 = vpack.c.bf16 %v2298, %v2298
        %v2315 = vpack.c.bf16 %v2299, %v2299
        %v2316 = vpack.c.bf16 %v2300, %v2300
        %v2317 = vpack.c.bf16 %v2301, %v2301
        %v2318 = vpack.c.bf16 %v2302, %v2302
        %v2319 = vld [vmem:[%s5] sm:$0xf]
        %v2320 = vld [vmem:[%s6] sm:$0x1]
        %v2322 = vperm.slane %v2320, 0
        %v2340 = vunpack.c.l.b16 %v2303
        %v2341 = vunpack.c.l.b16 %v2304
        %v2342 = vunpack.c.l.b16 %v2305
        %v2343 = vunpack.c.l.b16 %v2306
        %v2344 = vunpack.c.l.b16 %v2307
        %v2345 = vunpack.c.l.b16 %v2308
        %v2346 = vunpack.c.l.b16 %v2309
        %v2347 = vunpack.c.l.b16 %v2310
        %v2348 = vunpack.c.l.b16 %v2311
        %v2349 = vunpack.c.l.b16 %v2312
        %v2350 = vunpack.c.l.b16 %v2313
        %v2351 = vunpack.c.l.b16 %v2314
        %v2352 = vunpack.c.l.b16 %v2315
        %v2353 = vunpack.c.l.b16 %v2316
        %v2354 = vunpack.c.l.b16 %v2317
        %v2355 = vunpack.c.l.b16 %v2318
        %v2356 = vpack.c.b16 %v2341, %v2340
        %v2357 = vpack.c.b16 %v2343, %v2342
        %v2358 = vpack.c.b16 %v2345, %v2344
        %v2359 = vpack.c.b16 %v2347, %v2346
        %v2360 = vpack.c.b16 %v2349, %v2348
        %v2361 = vpack.c.b16 %v2351, %v2350
        %v2362 = vpack.c.b16 %v2353, %v2352
        %v2363 = vpack.c.b16 %v2355, %v2354
        %v2365 = vsel %vm472, %v2356, 0
        %v2368 = vsel %vm472, %v2357, 0
        %v2371 = vsel %vm472, %v2358, 0
        %v2374 = vsel %vm472, %v2359, 0
        %v2377 = vsel %vm472, %v2360, 0
        %v2380 = vsel %vm472, %v2361, 0
        %v2383 = vsel %vm472, %v2362, 0
        %v2386 = vsel %vm472, %v2363, 0
        %v2389 = vsel %vm497, %v2319, 0
        %2391 = vmatpush.bf16.msra.mxu0 0
        %2392 = vmatpush.bf16.msra.mxu0 0
        %2393 = vmatpush.bf16.msra.mxu0 0
        %2394 = vmatpush.bf16.msra.mxu0 0
        %2395 = vmatpush.bf16.msra.mxu0 0
        %2396 = vmatpush.bf16.msra.mxu0 0
        %2397 = vmatpush.bf16.msra.mxu0 0
        %2398 = vmatpush.bf16.msra.mxu0 %v2389
        %2399 = vmatmul.bf16.gmra.mxu0 %v2365
        %v2400 = vpop.f32.mrf.mxu0
        %v2401 = vadd.f32 %v2322, %v2400
        %v2402 = vpop.f32.mrf.mxu0
        %v2403 = vadd.f32 %v2322, %v2402
        %2404 = vmatmul.bf16.gmra.mxu0 %v2368
        %v2405 = vpop.f32.mrf.mxu0
        %v2406 = vadd.f32 %v2322, %v2405
        %v2407 = vpop.f32.mrf.mxu0
        %v2408 = vadd.f32 %v2322, %v2407
        %2409 = vmatmul.bf16.gmra.mxu0 %v2371
        %v2410 = vpop.f32.mrf.mxu0
        %v2411 = vadd.f32 %v2322, %v2410
        %v2412 = vpop.f32.mrf.mxu0
        %v2413 = vadd.f32 %v2322, %v2412
        %2414 = vmatmul.bf16.gmra.mxu0 %v2374
        %v2415 = vpop.f32.mrf.mxu0
        %v2416 = vadd.f32 %v2322, %v2415
        %v2417 = vpop.f32.mrf.mxu0
        %v2418 = vadd.f32 %v2322, %v2417
        %2419 = vmatmul.bf16.gmra.mxu0 %v2377
        %v2420 = vpop.f32.mrf.mxu0
        %v2421 = vadd.f32 %v2322, %v2420
        %v2422 = vpop.f32.mrf.mxu0
        %v2423 = vadd.f32 %v2322, %v2422
        %2424 = vmatmul.bf16.gmra.mxu0 %v2380
        %v2425 = vpop.f32.mrf.mxu0
        %v2426 = vadd.f32 %v2322, %v2425
        %v2427 = vpop.f32.mrf.mxu0
        %v2428 = vadd.f32 %v2322, %v2427
        %2429 = vmatmul.bf16.gmra.mxu0 %v2383
        %v2430 = vpop.f32.mrf.mxu0
        %v2431 = vadd.f32 %v2322, %v2430
        %v2432 = vpop.f32.mrf.mxu0
        %v2433 = vadd.f32 %v2322, %v2432
        %2434 = vmatmul.bf16.gmra.mxu0 %v2386
        %v2435 = vpop.f32.mrf.mxu0
        %v2436 = vadd.f32 %v2322, %v2435
        %v2437 = vpop.f32.mrf.mxu0
        %v2438 = vadd.f32 %v2322, %v2437
        %2439 = vdwg.mxu0
        %v2440 = vmax.f32 %v2401, 0.0
        %v2441 = vmax.f32 %v2403, 0.0
        %v2442 = vmax.f32 %v2406, 0.0
        %v2443 = vmax.f32 %v2408, 0.0
        %v2444 = vmax.f32 %v2411, 0.0
        %v2445 = vmax.f32 %v2413, 0.0
        %v2446 = vmax.f32 %v2416, 0.0
        %v2447 = vmax.f32 %v2418, 0.0
        %v2448 = vmax.f32 %v2421, 0.0
        %v2449 = vmax.f32 %v2423, 0.0
        %v2450 = vmax.f32 %v2426, 0.0
        %v2451 = vmax.f32 %v2428, 0.0
        %v2452 = vmax.f32 %v2431, 0.0
        %v2453 = vmax.f32 %v2433, 0.0
        %v2454 = vmax.f32 %v2436, 0.0
        %v2455 = vmax.f32 %v2438, 0.0
        %v2456 = vpack.c.bf16 %v2440, %v2440
        %v2457 = vpack.c.bf16 %v2441, %v2441
        %v2458 = vpack.c.bf16 %v2442, %v2442
        %v2459 = vpack.c.bf16 %v2443, %v2443
        %v2460 = vpack.c.bf16 %v2444, %v2444
        %v2461 = vpack.c.bf16 %v2445, %v2445
        %v2462 = vpack.c.bf16 %v2446, %v2446
        %v2463 = vpack.c.bf16 %v2447, %v2447
        %v2464 = vpack.c.bf16 %v2448, %v2448
        %v2465 = vpack.c.bf16 %v2449, %v2449
        %v2466 = vpack.c.bf16 %v2450, %v2450
        %v2467 = vpack.c.bf16 %v2451, %v2451
        %v2468 = vpack.c.bf16 %v2452, %v2452
        %v2469 = vpack.c.bf16 %v2453, %v2453
        %v2470 = vpack.c.bf16 %v2454, %v2454
        %v2471 = vpack.c.bf16 %v2455, %v2455
        %v2472 = vld [vmem:[%s7] sm:$0xf]
        %v2473 = vld [vmem:[%s7 + $0x4] sm:$0xf]
        %v2474 = vld [vmem:[%s8] sm:$0x1]
        %v2476 = vperm.slane %v2474, 0
        %v2494 = vunpack.c.l.b16 %v2456
        %v2495 = vunpack.c.l.b16 %v2457
        %v2496 = vunpack.c.l.b16 %v2458
        %v2497 = vunpack.c.l.b16 %v2459
        %v2498 = vunpack.c.l.b16 %v2460
        %v2499 = vunpack.c.l.b16 %v2461
        %v2500 = vunpack.c.l.b16 %v2462
        %v2501 = vunpack.c.l.b16 %v2463
        %v2502 = vunpack.c.l.b16 %v2464
        %v2503 = vunpack.c.l.b16 %v2465
        %v2504 = vunpack.c.l.b16 %v2466
        %v2505 = vunpack.c.l.b16 %v2467
        %v2506 = vunpack.c.l.b16 %v2468
        %v2507 = vunpack.c.l.b16 %v2469
        %v2508 = vunpack.c.l.b16 %v2470
        %v2509 = vunpack.c.l.b16 %v2471
        %v2510 = vpack.c.b16 %v2495, %v2494
        %v2511 = vpack.c.b16 %v2497, %v2496
        %v2512 = vpack.c.b16 %v2499, %v2498
        %v2513 = vpack.c.b16 %v2501, %v2500
        %v2514 = vpack.c.b16 %v2503, %v2502
        %v2515 = vpack.c.b16 %v2505, %v2504
        %v2516 = vpack.c.b16 %v2507, %v2506
        %v2517 = vpack.c.b16 %v2509, %v2508
        %v2520 = vunpack.c.l.b16 %v2472
        %v2521 = vunpack.c.l.b16 %v2473
        %v2522 = vpack.c.b16 %v2521, %v2520
        %vm2524 = vcmask 130048
        %v2526 = vsel %vm2524, %v2510, 0
        %v2529 = vsel %vm2524, %v2511, 0
        %v2532 = vsel %vm2524, %v2512, 0
        %v2535 = vsel %vm2524, %v2513, 0
        %v2538 = vsel %vm2524, %v2514, 0
        %v2541 = vsel %vm2524, %v2515, 0
        %v2544 = vsel %vm2524, %v2516, 0
        %v2547 = vsel %vm2524, %v2517, 0
        %2549 = vmatpush.bf16.msra.mxu0 0
        %2550 = vmatpush.bf16.msra.mxu0 0
        %2551 = vmatpush.bf16.msra.mxu0 0
        %2552 = vmatpush.bf16.msra.mxu0 0
        %2553 = vmatpush.bf16.msra.mxu0 0
        %2554 = vmatpush.bf16.msra.mxu0 0
        %2555 = vmatpush.bf16.msra.mxu0 0
        %2556 = vmatpush.bf16.msra.mxu0 %v2522
        %2557 = vmatmul.bf16.gmra.mxu0 %v2526
        %v2558 = vpop.f32.mrf.mxu0
        %v2559 = vadd.f32 %v2476, %v2558
        %v2560 = vpop.f32.mrf.mxu0
        %v2561 = vadd.f32 %v2476, %v2560
        %2562 = vmatmul.bf16.gmra.mxu0 %v2529
        %v2563 = vpop.f32.mrf.mxu0
        %v2564 = vadd.f32 %v2476, %v2563
        %v2565 = vpop.f32.mrf.mxu0
        %v2566 = vadd.f32 %v2476, %v2565
        %2567 = vmatmul.bf16.gmra.mxu0 %v2532
        %v2568 = vpop.f32.mrf.mxu0
        %v2569 = vadd.f32 %v2476, %v2568
        %v2570 = vpop.f32.mrf.mxu0
        %v2571 = vadd.f32 %v2476, %v2570
        %2572 = vmatmul.bf16.gmra.mxu0 %v2535
        %v2573 = vpop.f32.mrf.mxu0
        %v2574 = vadd.f32 %v2476, %v2573
        %v2575 = vpop.f32.mrf.mxu0
        %v2576 = vadd.f32 %v2476, %v2575
        %2577 = vmatmul.bf16.gmra.mxu0 %v2538
        %v2578 = vpop.f32.mrf.mxu0
        %v2579 = vadd.f32 %v2476, %v2578
        %v2580 = vpop.f32.mrf.mxu0
        %v2581 = vadd.f32 %v2476, %v2580
        %2582 = vmatmul.bf16.gmra.mxu0 %v2541
        %v2583 = vpop.f32.mrf.mxu0
        %v2584 = vadd.f32 %v2476, %v2583
        %v2585 = vpop.f32.mrf.mxu0
        %v2586 = vadd.f32 %v2476, %v2585
        %2587 = vmatmul.bf16.gmra.mxu0 %v2544
        %v2588 = vpop.f32.mrf.mxu0
        %v2589 = vadd.f32 %v2476, %v2588
        %v2590 = vpop.f32.mrf.mxu0
        %v2591 = vadd.f32 %v2476, %v2590
        %2592 = vmatmul.bf16.gmra.mxu0 %v2547
        %v2593 = vpop.f32.mrf.mxu0
        %v2594 = vadd.f32 %v2476, %v2593
        %v2595 = vpop.f32.mrf.mxu0
        %v2596 = vadd.f32 %v2476, %v2595
        %2597 = vdwg.mxu0
        %v2598 = vadd.f32 %v2559, %v2287
        %v2599 = vadd.f32 %v2561, %v2288
        %v2600 = vadd.f32 %v2564, %v2289
        %v2601 = vadd.f32 %v2566, %v2290
        %v2602 = vadd.f32 %v2569, %v2291
        %v2603 = vadd.f32 %v2571, %v2292
        %v2604 = vadd.f32 %v2574, %v2293
        %v2605 = vadd.f32 %v2576, %v2294
        %v2606 = vadd.f32 %v2579, %v2295
        %v2607 = vadd.f32 %v2581, %v2296
        %v2608 = vadd.f32 %v2584, %v2297
        %v2609 = vadd.f32 %v2586, %v2298
        %v2610 = vadd.f32 %v2589, %v2299
        %v2611 = vadd.f32 %v2591, %v2300
        %v2612 = vadd.f32 %v2594, %v2301
        %v2613 = vadd.f32 %v2596, %v2302
        %v2614 = vmul.f32 %v2598, 0.70710677
        %v2615 = vmul.f32 %v2599, 0.70710677
        %v2616 = vmul.f32 %v2600, 0.70710677
        %v2617 = vmul.f32 %v2601, 0.70710677
        %v2618 = vmul.f32 %v2602, 0.70710677
        %v2619 = vmul.f32 %v2603, 0.70710677
        %v2620 = vmul.f32 %v2604, 0.70710677
        %v2621 = vmul.f32 %v2605, 0.70710677
        %v2622 = vmul.f32 %v2606, 0.70710677
        %v2623 = vmul.f32 %v2607, 0.70710677
        %v2624 = vmul.f32 %v2608, 0.70710677
        %v2625 = vmul.f32 %v2609, 0.70710677
        %v2626 = vmul.f32 %v2610, 0.70710677
        %v2627 = vmul.f32 %v2611, 0.70710677
        %v2628 = vmul.f32 %v2612, 0.70710677
        %v2629 = vmul.f32 %v2613, 0.70710677
        %v2630 = vrot.slane %v2618, 4
        %vm2631 = vcmask 1047556
        %v2632 = vsel %vm2631, %v2630, %v2614
        %v2633 = vrot.slane %v2614, 4
        %v2634 = vsel %vm2631, %v2618, %v2633
        %v2636 = vunpack.c.l.s4 1983009808
        %v2637 = vunpack.c.0.s8 %v2636
        %v2638 = vperm.slane %v2632, %v2637
        %v2640 = vunpack.c.l.s4 1983009808
        %v2641 = vunpack.c.0.s8 %v2640
        %v2642 = vperm.slane %v2634, %v2641
        %v2643 = vrot.slane %v2620, 4
        %v2644 = vsel %vm2631, %v2643, %v2616
        %v2645 = vrot.slane %v2616, 4
        %v2646 = vsel %vm2631, %v2620, %v2645
        %v2648 = vunpack.c.l.s4 1983009808
        %v2649 = vunpack.c.0.s8 %v2648
        %v2650 = vperm.slane %v2644, %v2649
        %v2652 = vunpack.c.l.s4 1983009808
        %v2653 = vunpack.c.0.s8 %v2652
        %v2654 = vperm.slane %v2646, %v2653
        %v2655 = vrot.slane %v2626, 4
        %v2656 = vsel %vm2631, %v2655, %v2622
        %v2657 = vrot.slane %v2622, 4
        %v2658 = vsel %vm2631, %v2626, %v2657
        %v2660 = vunpack.c.l.s4 1983009808
        %v2661 = vunpack.c.0.s8 %v2660
        %v2662 = vperm.slane %v2656, %v2661
        %v2664 = vunpack.c.l.s4 1983009808
        %v2665 = vunpack.c.0.s8 %v2664
        %v2666 = vperm.slane %v2658, %v2665
        %v2667 = vrot.slane %v2628, 4
        %v2668 = vsel %vm2631, %v2667, %v2624
        %v2669 = vrot.slane %v2624, 4
        %v2670 = vsel %vm2631, %v2628, %v2669
        %v2672 = vunpack.c.l.s4 1983009808
        %v2673 = vunpack.c.0.s8 %v2672
        %v2674 = vperm.slane %v2668, %v2673
        %v2676 = vunpack.c.l.s4 1983009808
        %v2677 = vunpack.c.0.s8 %v2676
        %v2678 = vperm.slane %v2670, %v2677
        %v2679 = vrot.slane %v2650, 4
        %v2680 = vsel %vm2631, %v2679, %v2638
        %v2681 = vrot.slane %v2638, 4
        %v2682 = vsel %vm2631, %v2650, %v2681
        %v2684 = vunpack.c.l.s4 1934713408
        %v2685 = vunpack.c.0.s8 %v2684
        %v2686 = vperm.slane %v2680, %v2685
        %v2688 = vunpack.c.l.s4 1934713408
        %v2689 = vunpack.c.0.s8 %v2688
        %v2690 = vperm.slane %v2682, %v2689
        %v2691 = vrot.slane %v2654, 4
        %v2692 = vsel %vm2631, %v2691, %v2642
        %v2693 = vrot.slane %v2642, 4
        %v2694 = vsel %vm2631, %v2654, %v2693
        %v2696 = vunpack.c.l.s4 1934713408
        %v2697 = vunpack.c.0.s8 %v2696
        %v2698 = vperm.slane %v2692, %v2697
        %v2700 = vunpack.c.l.s4 1934713408
        %v2701 = vunpack.c.0.s8 %v2700
        %v2702 = vperm.slane %v2694, %v2701
        %v2703 = vrot.slane %v2674, 4
        %v2704 = vsel %vm2631, %v2703, %v2662
        %v2705 = vrot.slane %v2662, 4
        %v2706 = vsel %vm2631, %v2674, %v2705
        %v2708 = vunpack.c.l.s4 1934713408
        %v2709 = vunpack.c.0.s8 %v2708
        %v2710 = vperm.slane %v2704, %v2709
        %v2712 = vunpack.c.l.s4 1934713408
        %v2713 = vunpack.c.0.s8 %v2712
        %v2714 = vperm.slane %v2706, %v2713
        %v2715 = vrot.slane %v2678, 4
        %v2716 = vsel %vm2631, %v2715, %v2666
        %v2717 = vrot.slane %v2666, 4
        %v2718 = vsel %vm2631, %v2678, %v2717
        %v2720 = vunpack.c.l.s4 1934713408
        %v2721 = vunpack.c.0.s8 %v2720
        %v2722 = vperm.slane %v2716, %v2721
        %v2724 = vunpack.c.l.s4 1934713408
        %v2725 = vunpack.c.0.s8 %v2724
        %v2726 = vperm.slane %v2718, %v2725
        %v2727 = vrot.slane %v2710, 4
        %v2728 = vsel %vm2631, %v2727, %v2686
        %v2729 = vrot.slane %v2686, 4
        %v2730 = vsel %vm2631, %v2710, %v2729
        %v2731 = vrot.slane %v2714, 4
        %v2732 = vsel %vm2631, %v2731, %v2690
        %v2733 = vrot.slane %v2690, 4
        %v2734 = vsel %vm2631, %v2714, %v2733
        %v2735 = vrot.slane %v2722, 4
        %v2736 = vsel %vm2631, %v2735, %v2698
        %v2737 = vrot.slane %v2698, 4
        %v2738 = vsel %vm2631, %v2722, %v2737
        %v2739 = vrot.slane %v2726, 4
        %v2740 = vsel %vm2631, %v2739, %v2702
        %v2741 = vrot.slane %v2702, 4
        %v2742 = vsel %vm2631, %v2726, %v2741
        %v2743 = vrot.slane %v2619, 4
        %v2744 = vsel %vm2631, %v2743, %v2615
        %v2745 = vrot.slane %v2615, 4
        %v2746 = vsel %vm2631, %v2619, %v2745
        %v2748 = vunpack.c.l.s4 1983009808
        %v2749 = vunpack.c.0.s8 %v2748
        %v2750 = vperm.slane %v2744, %v2749
        %v2752 = vunpack.c.l.s4 1983009808
        %v2753 = vunpack.c.0.s8 %v2752
        %v2754 = vperm.slane %v2746, %v2753
        %v2755 = vrot.slane %v2621, 4
        %v2756 = vsel %vm2631, %v2755, %v2617
        %v2757 = vrot.slane %v2617, 4
        %v2758 = vsel %vm2631, %v2621, %v2757
        %v2760 = vunpack.c.l.s4 1983009808
        %v2761 = vunpack.c.0.s8 %v2760
        %v2762 = vperm.slane %v2756, %v2761
        %v2764 = vunpack.c.l.s4 1983009808
        %v2765 = vunpack.c.0.s8 %v2764
        %v2766 = vperm.slane %v2758, %v2765
        %v2767 = vrot.slane %v2627, 4
        %v2768 = vsel %vm2631, %v2767, %v2623
        %v2769 = vrot.slane %v2623, 4
        %v2770 = vsel %vm2631, %v2627, %v2769
        %v2772 = vunpack.c.l.s4 1983009808
        %v2773 = vunpack.c.0.s8 %v2772
        %v2774 = vperm.slane %v2768, %v2773
        %v2776 = vunpack.c.l.s4 1983009808
        %v2777 = vunpack.c.0.s8 %v2776
        %v2778 = vperm.slane %v2770, %v2777
        %v2779 = vrot.slane %v2629, 4
        %v2780 = vsel %vm2631, %v2779, %v2625
        %v2781 = vrot.slane %v2625, 4
        %v2782 = vsel %vm2631, %v2629, %v2781
        %v2784 = vunpack.c.l.s4 1983009808
        %v2785 = vunpack.c.0.s8 %v2784
        %v2786 = vperm.slane %v2780, %v2785
        %v2788 = vunpack.c.l.s4 1983009808
        %v2789 = vunpack.c.0.s8 %v2788
        %v2790 = vperm.slane %v2782, %v2789
        %v2791 = vrot.slane %v2762, 4
        %v2792 = vsel %vm2631, %v2791, %v2750
        %v2793 = vrot.slane %v2750, 4
        %v2794 = vsel %vm2631, %v2762, %v2793
        %v2796 = vunpack.c.l.s4 1934713408
        %v2797 = vunpack.c.0.s8 %v2796
        %v2798 = vperm.slane %v2792, %v2797
        %v2800 = vunpack.c.l.s4 1934713408
        %v2801 = vunpack.c.0.s8 %v2800
        %v2802 = vperm.slane %v2794, %v2801
        %v2803 = vrot.slane %v2766, 4
        %v2804 = vsel %vm2631, %v2803, %v2754
        %v2805 = vrot.slane %v2754, 4
        %v2806 = vsel %vm2631, %v2766, %v2805
        %v2808 = vunpack.c.l.s4 1934713408
        %v2809 = vunpack.c.0.s8 %v2808
        %v2810 = vperm.slane %v2804, %v2809
        %v2812 = vunpack.c.l.s4 1934713408
        %v2813 = vunpack.c.0.s8 %v2812
        %v2814 = vperm.slane %v2806, %v2813
        %v2815 = vrot.slane %v2786, 4
        %v2816 = vsel %vm2631, %v2815, %v2774
        %v2817 = vrot.slane %v2774, 4
        %v2818 = vsel %vm2631, %v2786, %v2817
        %v2820 = vunpack.c.l.s4 1934713408
        %v2821 = vunpack.c.0.s8 %v2820
        %v2822 = vperm.slane %v2816, %v2821
        %v2824 = vunpack.c.l.s4 1934713408
        %v2825 = vunpack.c.0.s8 %v2824
        %v2826 = vperm.slane %v2818, %v2825
        %v2827 = vrot.slane %v2790, 4
        %v2828 = vsel %vm2631, %v2827, %v2778
        %v2829 = vrot.slane %v2778, 4
        %v2830 = vsel %vm2631, %v2790, %v2829
        %v2832 = vunpack.c.l.s4 1934713408
        %v2833 = vunpack.c.0.s8 %v2832
        %v2834 = vperm.slane %v2828, %v2833
        %v2836 = vunpack.c.l.s4 1934713408
        %v2837 = vunpack.c.0.s8 %v2836
        %v2838 = vperm.slane %v2830, %v2837
        %v2839 = vrot.slane %v2822, 4
        %v2840 = vsel %vm2631, %v2839, %v2798
        %v2841 = vrot.slane %v2798, 4
        %v2842 = vsel %vm2631, %v2822, %v2841
        %v2843 = vrot.slane %v2826, 4
        %v2844 = vsel %vm2631, %v2843, %v2802
        %v2845 = vrot.slane %v2802, 4
        %v2846 = vsel %vm2631, %v2826, %v2845
        %v2847 = vrot.slane %v2834, 4
        %v2848 = vsel %vm2631, %v2847, %v2810
        %v2849 = vrot.slane %v2810, 4
        %v2850 = vsel %vm2631, %v2834, %v2849
        %v2851 = vrot.slane %v2838, 4
        %v2852 = vsel %vm2631, %v2851, %v2814
        %v2853 = vrot.slane %v2814, 4
        %v2854 = vsel %vm2631, %v2838, %v2853
        %2856 = vrot.lane.b32.xlu0 %v2730, 8
        %v2857 = vpop.permute.xlu0 %2856
        %2860 = vrot.lane.b32.xlu0 %v2732, 16
        %v2861 = vpop.permute.xlu0 %2860
        %2864 = vrot.lane.b32.xlu0 %v2734, 24
        %v2865 = vpop.permute.xlu0 %2864
        %2868 = vrot.lane.b32.xlu0 %v2736, 32
        %v2869 = vpop.permute.xlu0 %2868
        %2872 = vrot.lane.b32.xlu0 %v2738, 40
        %v2873 = vpop.permute.xlu0 %2872
        %2876 = vrot.lane.b32.xlu0 %v2740, 48
        %v2877 = vpop.permute.xlu0 %2876
        %2880 = vrot.lane.b32.xlu0 %v2742, 56
        %v2881 = vpop.permute.xlu0 %2880
        %2884 = vrot.lane.b32.xlu0 %v2840, 64
        %v2885 = vpop.permute.xlu0 %2884
        %2888 = vrot.lane.b32.xlu0 %v2842, 72
        %v2889 = vpop.permute.xlu0 %2888
        %2892 = vrot.lane.b32.xlu0 %v2844, 80
        %v2893 = vpop.permute.xlu0 %2892
        %2896 = vrot.lane.b32.xlu0 %v2846, 88
        %v2897 = vpop.permute.xlu0 %2896
        %2900 = vrot.lane.b32.xlu0 %v2848, 96
        %v2901 = vpop.permute.xlu0 %2900
        %2904 = vrot.lane.b32.xlu0 %v2850, 104
        %v2905 = vpop.permute.xlu0 %2904
        %2908 = vrot.lane.b32.xlu0 %v2852, 112
        %v2909 = vpop.permute.xlu0 %2908
        %2912 = vrot.lane.b32.xlu0 %v2854, 120
        %v2913 = vpop.permute.xlu0 %2912
        %v2915 = vsel %vm472, %v2728, %v2857
        %v2916 = vsel %vm2524, %v2915, %v2861
        %vm2917 = vcmask 195584
        %v2918 = vsel %vm2917, %v2916, %v2865
        %vm2919 = vcmask 261120
        %v2920 = vsel %vm2919, %v2918, %v2869
        %vm2921 = vcmask 326656
        %v2922 = vsel %vm2921, %v2920, %v2873
        %vm2923 = vcmask 392192
        %v2924 = vsel %vm2923, %v2922, %v2877
        %vm2925 = vcmask 457728
        %v2926 = vsel %vm2925, %v2924, %v2881
        %vm2927 = vcmask 523264
        %v2928 = vsel %vm2927, %v2926, %v2885
        %vm2929 = vcmask 588800
        %v2930 = vsel %vm2929, %v2928, %v2889
        %vm2931 = vcmask 654336
        %v2932 = vsel %vm2931, %v2930, %v2893
        %vm2933 = vcmask 719872
        %v2934 = vsel %vm2933, %v2932, %v2897
        %vm2935 = vcmask 785408
        %v2936 = vsel %vm2935, %v2934, %v2901
        %vm2937 = vcmask 850944
        %v2938 = vsel %vm2937, %v2936, %v2905
        %vm2939 = vcmask 916480
        %v2940 = vsel %vm2939, %v2938, %v2909
        %vm2941 = vcmask 982016
        %v2942 = vsel %vm2941, %v2940, %v2913
        %2943 = vst [vmem:[%s377] sm:$0xff] %v2942
        %s2944 = sand.u32 %s250, 1
        %s2945 = scalar_lea.sflag [#allocation4], %s2944
        %s2946 = sand.u32 %s250, 1
        %s2947 = smul.addr %s2946, 8
        %s2948 = scalar_lea.vmem [#allocation3], %s2947
        // Predicated region
        $region57: #{tpu_custom_call.1} parent=55 // pred_check
          %p2949 = pneg %p260
        $region58: #{tpu_custom_call.1} parent=55 // pred_check_branch
          %2951 = sbr.rel (%p2949) target = $region60
        $region59: #{tpu_custom_call.1} parent=55 // pred_region
          %2953 = vsyncadd %s2945, 0
          %s2954 = smul.addr %s27, 2
          %s2955 = sadd.s32 %s28, %s2954
          %s2956 = smul.addr %s2955, 8
          %s2957 = scalar_lea.hbm %s9, %s2956
          %s2959 = sshll.u32 %s2948, 4
          %s2960 = int_to_ptr.vmem [resolvable:$true] %s2959
          %s2961 = sshll.u32 %s2957, 4
          %s2962 = int_to_ptr.hbm [resolvable:$true] %s2961
          %2964 = dma.vmem_to_hbm [thread:$0]  %s2960, 128, %s2962, %s2945
        $region60: #{tpu_custom_call.1} parent=55 // pred_fallthru
          _
      $region56: #{tpu_custom_call.1} parent=5 // pred_fallthru
        _
      %p2965 = scmp.le.s32.totalorder 2, %s18
      // Predicated region
      $region61: #{tpu_custom_call.1} parent=5 // pred_check
        %p2966 = pneg %p2965
      $region62: #{tpu_custom_call.1} parent=5 // pred_check_branch
        %2968 = sbr.rel (%p2966) target = $region64
      $region63: #{tpu_custom_call.1} parent=5 // pred_region
        %s2969 = ssub.s32 %s18, 2
        // Predicated region
        $region65: #{tpu_custom_call.1} parent=63 // pred_check
          %p2970 = pneg %p266
        $region66: #{tpu_custom_call.1} parent=63 // pred_check_branch
          %2972 = sbr.rel (%p2970) target = $region68
        $region67: #{tpu_custom_call.1} parent=63 // pred_region
          %s2973 = sand.u32 %s251, 1
          %s2974 = scalar_lea.sflag [#allocation4], %s2973
          %s2975 = sand.u32 %s251, 1
          %s2976 = smul.addr %s2975, 8
          %s2977 = scalar_lea.vmem [#allocation3], %s2976
          %2979 = dma.done %s2974, 128
        $region68: #{tpu_custom_call.1} parent=63 // pred_fallthru
          _
      $region64: #{tpu_custom_call.1} parent=5 // pred_fallthru
        _
    $region6: #{tpu_custom_call.1} parent=1 // loop_footer
      %s22 = sadd.s32 1, %s18
    $region7: #{tpu_custom_call.1} parent=1 // loop_footer_branch
      %17 = sbr.rel target = $region3
    $region8: #{tpu_custom_call.1} parent=1 // loop_exit
      _
    %2980 = vsyncpa [#allocation4], 1
    %s2981 = scalar_lea.sflag [#allocation4], 1
    %2982 = vsyncpa %s2981, 1

</llo_original>
